<compile_context>
chip_gen: v5e
topology: v5e:2x2
jax: 0.10.0
libtpu: 0.0.40
codegen_flags: <defaults>
</compile_context>

<pallas_src>
import jax
import jax.numpy as jnp
from jax import lax
from jax.experimental import pallas as pl
from jax.experimental.pallas import tpu as pltpu
import numpy as np

# ---- model hyper-parameters (small, consistent with the module's __init__) ----
VOCAB = 32          # input_size
EMB = 16            # embedding_size
HIDDEN = 32         # hidden_size
OUT = 8             # output_size
N_LAYERS = 1        # n_layers
DIRECTIONS = 2      # bidirectional
SEQ = 8             # len(input_sentence)
GATE_GROUP = 128    # lanes per packed gate group (vreg lane width)

# TODO(synk): n_layers > 1 would need a second stacked-layer kernel (or a loop
# of this kernel); the configured module uses n_layers=1.


# ----------------------------- fused Pallas kernel -----------------------------

def nernet_kernel(tokens_ref, table_f_ref, table_b_ref, w_hh_ref,
                  w_out_f_ref, w_out_b_ref, b_out_ref, out_ref, h_all_ref):
    """Fused embedding-gather + interleaved bi-LSTM + output Linear.

    tokens_ref  : (S,) int32 SMEM                  token ids
    table_f_ref : (VOCAB, 1, 4*GW) f32 VMEM        emb @ W_ih(fwd cols) + all biases
    table_b_ref : (VOCAB, 1, 4*GW) f32 VMEM        emb @ W_ih(bwd cols)
    w_hh_ref    : (2H, 4*GW) f32 VMEM              block-diag packed W_hh (both dirs)
    w_out_f_ref : (H, OUT) f32 VMEM                output Linear rows for fwd hidden
    w_out_b_ref : (H, OUT) f32 VMEM                output Linear rows for bwd hidden
    b_out_ref   : (1, OUT) f32 VMEM                output Linear bias
    out_ref     : (S, OUT) f32                     logits
    h_all_ref   : (S, 2H) f32 VMEM scratch         row t = [h_fwd(t) | h_bwd(S-1-t)]
    """
    S = out_ref.shape[0]
    H = h_all_ref.shape[1] // 2
    GW = table_f_ref.shape[2] // 4          # padded gate-group width (128)

    # --- loop-invariant hoists (off the serial recurrence chain) ---------------
    w_hh = w_hh_ref[...]                    # recurrent weights loaded once
    gx = [table_f_ref[tokens_ref[t]] + table_b_ref[tokens_ref[S - 1 - t]]
          for t in range(S)]                # all per-step input contributions

    # packed recurrent state: [h_fwd | h_bwd], [c_fwd | c_bwd] kept in vregs
    h = jnp.zeros((1, 2 * H), jnp.float32)
    c = jnp.zeros((1, 2 * H), jnp.float32)

    # fully unrolled time loop (S small, static): forward step t and backward
    # step S-1-t are interleaved so one MXU matmul + one cell update retires
    # both directions per step.
    for t in range(S):
        gates = gx[t] + jnp.dot(h, w_hh,
                                preferred_element_type=jnp.float32)   # (1, 4*GW)

        # all slices start on a 128-lane vreg boundary -> no XLU lane rotates
        i_g = jax.nn.sigmoid(gates[:, 0 * GW:0 * GW + 2 * H])   # [i_fwd | i_bwd]
        f_g = jax.nn.sigmoid(gates[:, 1 * GW:1 * GW + 2 * H])   # [f_fwd | f_bwd]
        o_g = jax.nn.sigmoid(gates[:, 2 * GW:2 * GW + 2 * H])   # [o_fwd | o_bwd]
        g_g = jnp.tanh(gates[:, 3 * GW:3 * GW + 2 * H])         # [g_fwd | g_bwd]

        c = f_g * c + i_g * g_g             # packed cell update (both dirs)
        h = o_g * jnp.tanh(c)

        # ONE packed row store per step (was two masked sub-vreg stores)
        h_all_ref[pl.ds(t, 1), :] = h

    # --- epilogue ---------------------------------------------------------------
    slab = h_all_ref[...]                   # (S, 2H)
    h_f = slab[:, 0:H]                      # forward hidden, already in position order
    h_b_rev = slab[:, H:2 * H]              # backward hidden, rows in reversed order

    # undo the backward-direction reversal with a static anti-diagonal permutation
    # (tiny MXU matmul; avoids any per-step reversed addressing)
    r = lax.broadcasted_iota(jnp.int32, (S, S), 0)
    q = lax.broadcasted_iota(jnp.int32, (S, S), 1)
    perm = jnp.where(r + q == S - 1, jnp.float32(1.0), jnp.float32(0.0))
    h_b = jnp.dot(perm, h_b_rev, preferred_element_type=jnp.float32)   # (S, H)

    out_ref[...] = (jnp.dot(h_f, w_out_f_ref[...], preferred_element_type=jnp.float32)
                    + jnp.dot(h_b, w_out_b_ref[...], preferred_element_type=jnp.float32)
                    + b_out_ref[...])


# --------------------------- pallas_call wrapper --------------------------------

_VMEM = pl.BlockSpec(memory_space=pltpu.MemorySpace.VMEM)
_SMEM = pl.BlockSpec(memory_space=pltpu.MemorySpace.SMEM)


def ner_forward(tokens, packed):
    """Mirrors NERNet.forward for batch=1 (the module's view(seq, 1, -1))."""
    S = tokens.shape[0]
    return pl.pallas_call(
        nernet_kernel,
        out_shape=jax.ShapeDtypeStruct((S, OUT), jnp.float32),
        in_specs=[_SMEM, _VMEM, _VMEM, _VMEM, _VMEM, _VMEM, _VMEM],
        out_specs=_VMEM,
        scratch_shapes=[pltpu.VMEM((S, 2 * HIDDEN), jnp.float32)],
    )(tokens, packed["table_f"], packed["table_b"], packed["w_hh"],
      packed["w_out_f"], packed["w_out_b"], packed["b_out"])


# ---------------------- parameter folding / packing -----------------------------

def pack_params(params):
    """Fold embedding @ W_ih + bias into per-token gate tables and pack both
    directions' recurrent weights block-diagonally into vreg-aligned 128-lane
    gate groups in order [i, f, o, g]. Pure one-time parameter preprocessing."""
    assert N_LAYERS == 1
    H = HIDDEN
    GW = GATE_GROUP
    pad_w = GW - 2 * H
    hp = lax.Precision.HIGHEST

    w_ih_f, w_hh_f, b_f = params["lstm"][(0, 0)]     # (EMB,4H), (H,4H), (1,4H)
    w_ih_b, w_hh_b, b_b = params["lstm"][(0, 1)]
    emb = params["embedding"]                        # (VOCAB, EMB)

    def gcols(w, g):                                  # gate-g columns of (in, 4H)
        return w[:, g * H:(g + 1) * H]

    zH = jnp.zeros((H, H), jnp.float32)
    zHp = jnp.zeros((2 * H, pad_w), jnp.float32)
    zE = jnp.zeros((EMB, H), jnp.float32)
    zEp = jnp.zeros((EMB, pad_w), jnp.float32)
    zb = jnp.zeros((1, pad_w), jnp.float32)

    # kernel group order [i, f, o, g] expressed in PyTorch gate indices (i,f,g,o)
    gate_order = (0, 1, 3, 2)

    whh_cols, wih_f_cols, wih_b_cols, bias_cols = [], [], [], []
    for gi in gate_order:
        # group layout: [ gate_fwd (H) | gate_bwd (H) | zero pad (GW-2H) ]
        whh_cols += [jnp.concatenate([gcols(w_hh_f, gi), zH], axis=0),
                     jnp.concatenate([zH, gcols(w_hh_b, gi)], axis=0),
                     zHp]
        wih_f_cols += [gcols(w_ih_f, gi), zE, zEp]
        wih_b_cols += [zE, gcols(w_ih_b, gi), zEp]
        bias_cols += [b_f[:, gi * H:(gi + 1) * H],
                      b_b[:, gi * H:(gi + 1) * H], zb]

    w_hh_packed = jnp.concatenate(whh_cols, axis=1)           # (2H, 4*GW)
    w_ih_f_packed = jnp.concatenate(wih_f_cols, axis=1)       # (EMB, 4*GW)
    w_ih_b_packed = jnp.concatenate(wih_b_cols, axis=1)       # (EMB, 4*GW)
    bias_packed = jnp.concatenate(bias_cols, axis=1)          # (1, 4*GW)

    table_f = jnp.dot(emb, w_ih_f_packed, precision=hp) + bias_packed
    table_b = jnp.dot(emb, w_ih_b_packed, precision=hp)

    return {
        # (VOCAB, 1, 4*GW): leading-dim dynamic row gather inside the kernel
        "table_f": table_f.reshape(VOCAB, 1, 4 * GW),
        "table_b": table_b.reshape(VOCAB, 1, 4 * GW),
        "w_hh": w_hh_packed,
        "w_out_f": params["out_w"][:H, :],    # output Linear rows hit by fwd hidden
        "w_out_b": params["out_w"][H:, :],    # output Linear rows hit by bwd hidden
        "b_out": params["out_b"],
    }


# --------------------------- pure-JAX reference ----------------------------------

def _lstm_dir_ref(x, w_ih, w_hh, b, H):
    hp = lax.Precision.HIGHEST

    def step(carry, x_t):
        h, c = carry
        gates = (jnp.dot(x_t, w_ih, precision=hp)
                 + jnp.dot(h, w_hh, precision=hp) + b[0])
        i = jax.nn.sigmoid(gates[0 * H:1 * H])
        f = jax.nn.sigmoid(gates[1 * H:2 * H])
        g = jnp.tanh(gates[2 * H:3 * H])
        o = jax.nn.sigmoid(gates[3 * H:4 * H])
        c = f * c + i * g
        h = o * jnp.tanh(c)
        return (h, c), h

    (_, _), hs = lax.scan(step, (jnp.zeros((H,), jnp.float32),
                                 jnp.zeros((H,), jnp.float32)), x)
    return hs


def ner_forward_ref(tokens, params):
    embedded = jnp.take(params["embedding"], tokens, axis=0)
    layer_in = embedded
    for l in range(N_LAYERS):
        outs = []
        for d in range(DIRECTIONS):
            w_ih, w_hh, b = params["lstm"][(l, d)]
            x = layer_in if d == 0 else layer_in[::-1]
            h = _lstm_dir_ref(x, w_ih, w_hh, b, HIDDEN)
            if d == 1:
                h = h[::-1]
            outs.append(h)
        layer_in = jnp.concatenate(outs, axis=-1)
    return (jnp.dot(layer_in, params["out_w"], precision=lax.Precision.HIGHEST)
            + params["out_b"][0])


# ------------------------------ parameter init -----------------------------------

def init_params(key):
    ks = jax.random.split(key, 4 + 4 * N_LAYERS * DIRECTIONS)
    k_iter = iter(ks)
    params = {}
    # nn.Embedding default init: N(0, 1)
    params["embedding"] = jax.random.normal(next(k_iter), (VOCAB, EMB),
                                            dtype=jnp.float32)
    # nn.LSTM default init: U(-k, k), k = 1/sqrt(hidden)
    k = 1.0 / np.sqrt(HIDDEN)
    params["lstm"] = {}
    for l in range(N_LAYERS):
        in_dim = EMB if l == 0 else HIDDEN * DIRECTIONS
        for d in range(DIRECTIONS):
            w_ih = jax.random.uniform(next(k_iter), (in_dim, 4 * HIDDEN),
                                      minval=-k, maxval=k, dtype=jnp.float32)
            w_hh = jax.random.uniform(next(k_iter), (HIDDEN, 4 * HIDDEN),
                                      minval=-k, maxval=k, dtype=jnp.float32)
            b_ih = jax.random.uniform(next(k_iter), (4 * HIDDEN,),
                                      minval=-k, maxval=k, dtype=jnp.float32)
            b_hh = jax.random.uniform(next(k_iter), (4 * HIDDEN,),
                                      minval=-k, maxval=k, dtype=jnp.float32)
            params["lstm"][(l, d)] = (w_ih, w_hh, (b_ih + b_hh)[None, :])
    # nn.Linear default init: U(-k2, k2), k2 = 1/sqrt(fan_in)
    k2 = 1.0 / np.sqrt(HIDDEN * DIRECTIONS)
    params["out_w"] = jax.random.uniform(next(k_iter),
                                         (HIDDEN * DIRECTIONS, OUT),
                                         minval=-k2, maxval=k2,
                                         dtype=jnp.float32)
    params["out_b"] = jax.random.uniform(next(k_iter), (1, OUT),
                                         minval=-k2, maxval=k2,
                                         dtype=jnp.float32)
    return params


# ----------------------------------- main ----------------------------------------

if __name__ == "__main__":
    key = jax.random.PRNGKey(0)
    k_params, k_tokens = jax.random.split(key)
    params = init_params(k_params)
    packed = pack_params(params)                       # one-time param folding
    input_sentence = jax.random.randint(k_tokens, (SEQ,), 0, VOCAB,
                                        dtype=jnp.int32)

    fwd = jax.jit(ner_forward)
    out = jax.block_until_ready(fwd(input_sentence, packed))
    assert out.shape == (SEQ, OUT), out.shape

    ref = jax.block_until_ready(ner_forward_ref(input_sentence, params))
    np.testing.assert_allclose(np.asarray(out), np.asarray(ref),
                               rtol=2e-2, atol=2e-2)

    print("KERNEL_OK")
</pallas_src>

<mosaic_0001>
module attributes {stable_mosaic.version = 11 : i64} {
  func.func @nernet_kernel(%arg0: memref<8xi32, #tpu.memory_space<smem>>, %arg1: memref<32x1x512xf32, #tpu.memory_space<vmem>>, %arg2: memref<32x1x512xf32, #tpu.memory_space<vmem>>, %arg3: memref<64x512xf32, #tpu.memory_space<vmem>>, %arg4: memref<32x8xf32, #tpu.memory_space<vmem>>, %arg5: memref<32x8xf32, #tpu.memory_space<vmem>>, %arg6: memref<1x8xf32, #tpu.memory_space<vmem>>, %arg7: memref<8x8xf32, #tpu.memory_space<vmem>>, %arg8: memref<8x64xf32, #tpu.memory_space<vmem>>) attributes {dimension_semantics = [], scalar_prefetch = 0 : i64, scratch_operands = 1 : i64, tpu.core_type = #tpu.core_type<tc>} {
    %c0 = arith.constant 0 : index
    %c0_0 = arith.constant 0 : index
    %0 = vector.load %arg3[%c0, %c0_0] : memref<64x512xf32, #tpu.memory_space<vmem>>, vector<64x512xf32>
    %c0_1 = arith.constant 0 : index
    %1 = memref.load %arg0[%c0_1] : memref<8xi32, #tpu.memory_space<smem>>
    %2 = arith.index_cast %1 : i32 to index
    %c0_2 = arith.constant 0 : index
    %c0_3 = arith.constant 0 : index
    %3 = vector.load %arg1[%2, %c0_2, %c0_3] : memref<32x1x512xf32, #tpu.memory_space<vmem>>, vector<1x1x512xf32>
    %4 = vector.shape_cast %3 : vector<1x1x512xf32> to vector<1x512xf32>
    %c7 = arith.constant 7 : index
    %5 = memref.load %arg0[%c7] : memref<8xi32, #tpu.memory_space<smem>>
    %6 = arith.index_cast %5 : i32 to index
    %c0_4 = arith.constant 0 : index
    %c0_5 = arith.constant 0 : index
    %7 = vector.load %arg2[%6, %c0_4, %c0_5] : memref<32x1x512xf32, #tpu.memory_space<vmem>>, vector<1x1x512xf32>
    %8 = vector.shape_cast %7 : vector<1x1x512xf32> to vector<1x512xf32>
    %9 = arith.addf %4, %8 : vector<1x512xf32>
    %c1 = arith.constant 1 : index
    %10 = memref.load %arg0[%c1] : memref<8xi32, #tpu.memory_space<smem>>
    %11 = arith.index_cast %10 : i32 to index
    %c0_6 = arith.constant 0 : index
    %c0_7 = arith.constant 0 : index
    %12 = vector.load %arg1[%11, %c0_6, %c0_7] : memref<32x1x512xf32, #tpu.memory_space<vmem>>, vector<1x1x512xf32>
    %13 = vector.shape_cast %12 : vector<1x1x512xf32> to vector<1x512xf32>
    %c6 = arith.constant 6 : index
    %14 = memref.load %arg0[%c6] : memref<8xi32, #tpu.memory_space<smem>>
    %15 = arith.index_cast %14 : i32 to index
    %c0_8 = arith.constant 0 : index
    %c0_9 = arith.constant 0 : index
    %16 = vector.load %arg2[%15, %c0_8, %c0_9] : memref<32x1x512xf32, #tpu.memory_space<vmem>>, vector<1x1x512xf32>
    %17 = vector.shape_cast %16 : vector<1x1x512xf32> to vector<1x512xf32>
    %18 = arith.addf %13, %17 : vector<1x512xf32>
    %c2 = arith.constant 2 : index
    %19 = memref.load %arg0[%c2] : memref<8xi32, #tpu.memory_space<smem>>
    %20 = arith.index_cast %19 : i32 to index
    %c0_10 = arith.constant 0 : index
    %c0_11 = arith.constant 0 : index
    %21 = vector.load %arg1[%20, %c0_10, %c0_11] : memref<32x1x512xf32, #tpu.memory_space<vmem>>, vector<1x1x512xf32>
    %22 = vector.shape_cast %21 : vector<1x1x512xf32> to vector<1x512xf32>
    %c5 = arith.constant 5 : index
    %23 = memref.load %arg0[%c5] : memref<8xi32, #tpu.memory_space<smem>>
    %24 = arith.index_cast %23 : i32 to index
    %c0_12 = arith.constant 0 : index
    %c0_13 = arith.constant 0 : index
    %25 = vector.load %arg2[%24, %c0_12, %c0_13] : memref<32x1x512xf32, #tpu.memory_space<vmem>>, vector<1x1x512xf32>
    %26 = vector.shape_cast %25 : vector<1x1x512xf32> to vector<1x512xf32>
    %27 = arith.addf %22, %26 : vector<1x512xf32>
    %c3 = arith.constant 3 : index
    %28 = memref.load %arg0[%c3] : memref<8xi32, #tpu.memory_space<smem>>
    %29 = arith.index_cast %28 : i32 to index
    %c0_14 = arith.constant 0 : index
    %c0_15 = arith.constant 0 : index
    %30 = vector.load %arg1[%29, %c0_14, %c0_15] : memref<32x1x512xf32, #tpu.memory_space<vmem>>, vector<1x1x512xf32>
    %31 = vector.shape_cast %30 : vector<1x1x512xf32> to vector<1x512xf32>
    %c4 = arith.constant 4 : index
    %32 = memref.load %arg0[%c4] : memref<8xi32, #tpu.memory_space<smem>>
    %33 = arith.index_cast %32 : i32 to index
    %c0_16 = arith.constant 0 : index
    %c0_17 = arith.constant 0 : index
    %34 = vector.load %arg2[%33, %c0_16, %c0_17] : memref<32x1x512xf32, #tpu.memory_space<vmem>>, vector<1x1x512xf32>
    %35 = vector.shape_cast %34 : vector<1x1x512xf32> to vector<1x512xf32>
    %36 = arith.addf %31, %35 : vector<1x512xf32>
    %c4_18 = arith.constant 4 : index
    %37 = memref.load %arg0[%c4_18] : memref<8xi32, #tpu.memory_space<smem>>
    %38 = arith.index_cast %37 : i32 to index
    %c0_19 = arith.constant 0 : index
    %c0_20 = arith.constant 0 : index
    %39 = vector.load %arg1[%38, %c0_19, %c0_20] : memref<32x1x512xf32, #tpu.memory_space<vmem>>, vector<1x1x512xf32>
    %40 = vector.shape_cast %39 : vector<1x1x512xf32> to vector<1x512xf32>
    %c3_21 = arith.constant 3 : index
    %41 = memref.load %arg0[%c3_21] : memref<8xi32, #tpu.memory_space<smem>>
    %42 = arith.index_cast %41 : i32 to index
    %c0_22 = arith.constant 0 : index
    %c0_23 = arith.constant 0 : index
    %43 = vector.load %arg2[%42, %c0_22, %c0_23] : memref<32x1x512xf32, #tpu.memory_space<vmem>>, vector<1x1x512xf32>
    %44 = vector.shape_cast %43 : vector<1x1x512xf32> to vector<1x512xf32>
    %45 = arith.addf %40, %44 : vector<1x512xf32>
    %c5_24 = arith.constant 5 : index
    %46 = memref.load %arg0[%c5_24] : memref<8xi32, #tpu.memory_space<smem>>
    %47 = arith.index_cast %46 : i32 to index
    %c0_25 = arith.constant 0 : index
    %c0_26 = arith.constant 0 : index
    %48 = vector.load %arg1[%47, %c0_25, %c0_26] : memref<32x1x512xf32, #tpu.memory_space<vmem>>, vector<1x1x512xf32>
    %49 = vector.shape_cast %48 : vector<1x1x512xf32> to vector<1x512xf32>
    %c2_27 = arith.constant 2 : index
    %50 = memref.load %arg0[%c2_27] : memref<8xi32, #tpu.memory_space<smem>>
    %51 = arith.index_cast %50 : i32 to index
    %c0_28 = arith.constant 0 : index
    %c0_29 = arith.constant 0 : index
    %52 = vector.load %arg2[%51, %c0_28, %c0_29] : memref<32x1x512xf32, #tpu.memory_space<vmem>>, vector<1x1x512xf32>
    %53 = vector.shape_cast %52 : vector<1x1x512xf32> to vector<1x512xf32>
    %54 = arith.addf %49, %53 : vector<1x512xf32>
    %c6_30 = arith.constant 6 : index
    %55 = memref.load %arg0[%c6_30] : memref<8xi32, #tpu.memory_space<smem>>
    %56 = arith.index_cast %55 : i32 to index
    %c0_31 = arith.constant 0 : index
    %c0_32 = arith.constant 0 : index
    %57 = vector.load %arg1[%56, %c0_31, %c0_32] : memref<32x1x512xf32, #tpu.memory_space<vmem>>, vector<1x1x512xf32>
    %58 = vector.shape_cast %57 : vector<1x1x512xf32> to vector<1x512xf32>
    %c1_33 = arith.constant 1 : index
    %59 = memref.load %arg0[%c1_33] : memref<8xi32, #tpu.memory_space<smem>>
    %60 = arith.index_cast %59 : i32 to index
    %c0_34 = arith.constant 0 : index
    %c0_35 = arith.constant 0 : index
    %61 = vector.load %arg2[%60, %c0_34, %c0_35] : memref<32x1x512xf32, #tpu.memory_space<vmem>>, vector<1x1x512xf32>
    %62 = vector.shape_cast %61 : vector<1x1x512xf32> to vector<1x512xf32>
    %63 = arith.addf %58, %62 : vector<1x512xf32>
    %c7_36 = arith.constant 7 : index
    %64 = memref.load %arg0[%c7_36] : memref<8xi32, #tpu.memory_space<smem>>
    %65 = arith.index_cast %64 : i32 to index
    %c0_37 = arith.constant 0 : index
    %c0_38 = arith.constant 0 : index
    %66 = vector.load %arg1[%65, %c0_37, %c0_38] : memref<32x1x512xf32, #tpu.memory_space<vmem>>, vector<1x1x512xf32>
    %67 = vector.shape_cast %66 : vector<1x1x512xf32> to vector<1x512xf32>
    %c0_39 = arith.constant 0 : index
    %68 = memref.load %arg0[%c0_39] : memref<8xi32, #tpu.memory_space<smem>>
    %69 = arith.index_cast %68 : i32 to index
    %c0_40 = arith.constant 0 : index
    %c0_41 = arith.constant 0 : index
    %70 = vector.load %arg2[%69, %c0_40, %c0_41] : memref<32x1x512xf32, #tpu.memory_space<vmem>>, vector<1x1x512xf32>
    %71 = vector.shape_cast %70 : vector<1x1x512xf32> to vector<1x512xf32>
    %72 = arith.addf %67, %71 : vector<1x512xf32>
    %cst = arith.constant 0.000000e+00 : f32
    %73 = vector.broadcast %cst : f32 to vector<1x64xf32>
    %cst_42 = arith.constant 0.000000e+00 : f32
    %74 = vector.broadcast %cst_42 : f32 to vector<1x64xf32>
    %cst_43 = arith.constant dense<0.000000e+00> : vector<1x512xf32>
    %75 = tpu.matmul %73, %0, %cst_43 {dimension_numbers = #tpu.dot_dimension_numbers<[1], [0], [0], [1], [0, 0, 1, 1], [], []>} : vector<1x64xf32>, vector<64x512xf32>, vector<1x512xf32> -> vector<1x512xf32>
    %76 = arith.addf %9, %75 : vector<1x512xf32>
    %77 = vector.extract_strided_slice %76 {offsets = [0, 0], sizes = [1, 64], strides = [1, 1]} : vector<1x512xf32> to vector<1x64xf32>
    %78 = arith.negf %77 : vector<1x64xf32>
    %79 = math.exp %78 : vector<1x64xf32>
    %cst_44 = arith.constant 1.000000e+00 : f32
    %80 = vector.broadcast %cst_44 : f32 to vector<1x64xf32>
    %81 = arith.addf %80, %79 : vector<1x64xf32>
    %82 = arith.divf %80, %81 : vector<1x64xf32>
    %83 = vector.extract_strided_slice %76 {offsets = [0, 128], sizes = [1, 64], strides = [1, 1]} : vector<1x512xf32> to vector<1x64xf32>
    %84 = arith.negf %83 : vector<1x64xf32>
    %85 = math.exp %84 : vector<1x64xf32>
    %cst_45 = arith.constant 1.000000e+00 : f32
    %86 = vector.broadcast %cst_45 : f32 to vector<1x64xf32>
    %87 = arith.addf %86, %85 : vector<1x64xf32>
    %88 = arith.divf %86, %87 : vector<1x64xf32>
    %89 = vector.extract_strided_slice %76 {offsets = [0, 256], sizes = [1, 64], strides = [1, 1]} : vector<1x512xf32> to vector<1x64xf32>
    %90 = arith.negf %89 : vector<1x64xf32>
    %91 = math.exp %90 : vector<1x64xf32>
    %cst_46 = arith.constant 1.000000e+00 : f32
    %92 = vector.broadcast %cst_46 : f32 to vector<1x64xf32>
    %93 = arith.addf %92, %91 : vector<1x64xf32>
    %94 = arith.divf %92, %93 : vector<1x64xf32>
    %95 = vector.extract_strided_slice %76 {offsets = [0, 384], sizes = [1, 64], strides = [1, 1]} : vector<1x512xf32> to vector<1x64xf32>
    %96 = math.tanh %95 : vector<1x64xf32>
    %97 = arith.mulf %88, %74 : vector<1x64xf32>
    %98 = arith.mulf %82, %96 : vector<1x64xf32>
    %99 = arith.addf %97, %98 : vector<1x64xf32>
    %100 = math.tanh %99 : vector<1x64xf32>
    %101 = arith.mulf %94, %100 : vector<1x64xf32>
    %c0_47 = arith.constant 0 : index
    %c0_48 = arith.constant 0 : index
    %102 = vector.load %arg8[%c0_47, %c0_48] : memref<8x64xf32, #tpu.memory_space<vmem>>, vector<1x64xf32>
    tpu.vector_store %arg8[%c0_47, %c0_48], %101 {strides = array<i32>} : memref<8x64xf32, #tpu.memory_space<vmem>>, vector<1x64xf32>,
    %cst_49 = arith.constant dense<0.000000e+00> : vector<1x512xf32>
    %103 = tpu.matmul %101, %0, %cst_49 {dimension_numbers = #tpu.dot_dimension_numbers<[1], [0], [0], [1], [0, 0, 1, 1], [], []>} : vector<1x64xf32>, vector<64x512xf32>, vector<1x512xf32> -> vector<1x512xf32>
    %104 = arith.addf %18, %103 : vector<1x512xf32>
    %105 = vector.extract_strided_slice %104 {offsets = [0, 0], sizes = [1, 64], strides = [1, 1]} : vector<1x512xf32> to vector<1x64xf32>
    %106 = arith.negf %105 : vector<1x64xf32>
    %107 = math.exp %106 : vector<1x64xf32>
    %cst_50 = arith.constant 1.000000e+00 : f32
    %108 = vector.broadcast %cst_50 : f32 to vector<1x64xf32>
    %109 = arith.addf %108, %107 : vector<1x64xf32>
    %110 = arith.divf %108, %109 : vector<1x64xf32>
    %111 = vector.extract_strided_slice %104 {offsets = [0, 128], sizes = [1, 64], strides = [1, 1]} : vector<1x512xf32> to vector<1x64xf32>
    %112 = arith.negf %111 : vector<1x64xf32>
    %113 = math.exp %112 : vector<1x64xf32>
    %cst_51 = arith.constant 1.000000e+00 : f32
    %114 = vector.broadcast %cst_51 : f32 to vector<1x64xf32>
    %115 = arith.addf %114, %113 : vector<1x64xf32>
    %116 = arith.divf %114, %115 : vector<1x64xf32>
    %117 = vector.extract_strided_slice %104 {offsets = [0, 256], sizes = [1, 64], strides = [1, 1]} : vector<1x512xf32> to vector<1x64xf32>
    %118 = arith.negf %117 : vector<1x64xf32>
    %119 = math.exp %118 : vector<1x64xf32>
    %cst_52 = arith.constant 1.000000e+00 : f32
    %120 = vector.broadcast %cst_52 : f32 to vector<1x64xf32>
    %121 = arith.addf %120, %119 : vector<1x64xf32>
    %122 = arith.divf %120, %121 : vector<1x64xf32>
    %123 = vector.extract_strided_slice %104 {offsets = [0, 384], sizes = [1, 64], strides = [1, 1]} : vector<1x512xf32> to vector<1x64xf32>
    %124 = math.tanh %123 : vector<1x64xf32>
    %125 = arith.mulf %116, %99 : vector<1x64xf32>
    %126 = arith.mulf %110, %124 : vector<1x64xf32>
    %127 = arith.addf %125, %126 : vector<1x64xf32>
    %128 = math.tanh %127 : vector<1x64xf32>
    %129 = arith.mulf %122, %128 : vector<1x64xf32>
    %c1_53 = arith.constant 1 : index
    %c0_54 = arith.constant 0 : index
    %130 = vector.load %arg8[%c1_53, %c0_54] : memref<8x64xf32, #tpu.memory_space<vmem>>, vector<1x64xf32>
    tpu.vector_store %arg8[%c1_53, %c0_54], %129 {strides = array<i32>} : memref<8x64xf32, #tpu.memory_space<vmem>>, vector<1x64xf32>,
    %cst_55 = arith.constant dense<0.000000e+00> : vector<1x512xf32>
    %131 = tpu.matmul %129, %0, %cst_55 {dimension_numbers = #tpu.dot_dimension_numbers<[1], [0], [0], [1], [0, 0, 1, 1], [], []>} : vector<1x64xf32>, vector<64x512xf32>, vector<1x512xf32> -> vector<1x512xf32>
    %132 = arith.addf %27, %131 : vector<1x512xf32>
    %133 = vector.extract_strided_slice %132 {offsets = [0, 0], sizes = [1, 64], strides = [1, 1]} : vector<1x512xf32> to vector<1x64xf32>
    %134 = arith.negf %133 : vector<1x64xf32>
    %135 = math.exp %134 : vector<1x64xf32>
    %cst_56 = arith.constant 1.000000e+00 : f32
    %136 = vector.broadcast %cst_56 : f32 to vector<1x64xf32>
    %137 = arith.addf %136, %135 : vector<1x64xf32>
    %138 = arith.divf %136, %137 : vector<1x64xf32>
    %139 = vector.extract_strided_slice %132 {offsets = [0, 128], sizes = [1, 64], strides = [1, 1]} : vector<1x512xf32> to vector<1x64xf32>
    %140 = arith.negf %139 : vector<1x64xf32>
    %141 = math.exp %140 : vector<1x64xf32>
    %cst_57 = arith.constant 1.000000e+00 : f32
    %142 = vector.broadcast %cst_57 : f32 to vector<1x64xf32>
    %143 = arith.addf %142, %141 : vector<1x64xf32>
    %144 = arith.divf %142, %143 : vector<1x64xf32>
    %145 = vector.extract_strided_slice %132 {offsets = [0, 256], sizes = [1, 64], strides = [1, 1]} : vector<1x512xf32> to vector<1x64xf32>
    %146 = arith.negf %145 : vector<1x64xf32>
    %147 = math.exp %146 : vector<1x64xf32>
    %cst_58 = arith.constant 1.000000e+00 : f32
    %148 = vector.broadcast %cst_58 : f32 to vector<1x64xf32>
    %149 = arith.addf %148, %147 : vector<1x64xf32>
    %150 = arith.divf %148, %149 : vector<1x64xf32>
    %151 = vector.extract_strided_slice %132 {offsets = [0, 384], sizes = [1, 64], strides = [1, 1]} : vector<1x512xf32> to vector<1x64xf32>
    %152 = math.tanh %151 : vector<1x64xf32>
    %153 = arith.mulf %144, %127 : vector<1x64xf32>
    %154 = arith.mulf %138, %152 : vector<1x64xf32>
    %155 = arith.addf %153, %154 : vector<1x64xf32>
    %156 = math.tanh %155 : vector<1x64xf32>
    %157 = arith.mulf %150, %156 : vector<1x64xf32>
    %c2_59 = arith.constant 2 : index
    %c0_60 = arith.constant 0 : index
    %158 = vector.load %arg8[%c2_59, %c0_60] : memref<8x64xf32, #tpu.memory_space<vmem>>, vector<1x64xf32>
    tpu.vector_store %arg8[%c2_59, %c0_60], %157 {strides = array<i32>} : memref<8x64xf32, #tpu.memory_space<vmem>>, vector<1x64xf32>,
    %cst_61 = arith.constant dense<0.000000e+00> : vector<1x512xf32>
    %159 = tpu.matmul %157, %0, %cst_61 {dimension_numbers = #tpu.dot_dimension_numbers<[1], [0], [0], [1], [0, 0, 1, 1], [], []>} : vector<1x64xf32>, vector<64x512xf32>, vector<1x512xf32> -> vector<1x512xf32>
    %160 = arith.addf %36, %159 : vector<1x512xf32>
    %161 = vector.extract_strided_slice %160 {offsets = [0, 0], sizes = [1, 64], strides = [1, 1]} : vector<1x512xf32> to vector<1x64xf32>
    %162 = arith.negf %161 : vector<1x64xf32>
    %163 = math.exp %162 : vector<1x64xf32>
    %cst_62 = arith.constant 1.000000e+00 : f32
    %164 = vector.broadcast %cst_62 : f32 to vector<1x64xf32>
    %165 = arith.addf %164, %163 : vector<1x64xf32>
    %166 = arith.divf %164, %165 : vector<1x64xf32>
    %167 = vector.extract_strided_slice %160 {offsets = [0, 128], sizes = [1, 64], strides = [1, 1]} : vector<1x512xf32> to vector<1x64xf32>
    %168 = arith.negf %167 : vector<1x64xf32>
    %169 = math.exp %168 : vector<1x64xf32>
    %cst_63 = arith.constant 1.000000e+00 : f32
    %170 = vector.broadcast %cst_63 : f32 to vector<1x64xf32>
    %171 = arith.addf %170, %169 : vector<1x64xf32>
    %172 = arith.divf %170, %171 : vector<1x64xf32>
    %173 = vector.extract_strided_slice %160 {offsets = [0, 256], sizes = [1, 64], strides = [1, 1]} : vector<1x512xf32> to vector<1x64xf32>
    %174 = arith.negf %173 : vector<1x64xf32>
    %175 = math.exp %174 : vector<1x64xf32>
    %cst_64 = arith.constant 1.000000e+00 : f32
    %176 = vector.broadcast %cst_64 : f32 to vector<1x64xf32>
    %177 = arith.addf %176, %175 : vector<1x64xf32>
    %178 = arith.divf %176, %177 : vector<1x64xf32>
    %179 = vector.extract_strided_slice %160 {offsets = [0, 384], sizes = [1, 64], strides = [1, 1]} : vector<1x512xf32> to vector<1x64xf32>
    %180 = math.tanh %179 : vector<1x64xf32>
    %181 = arith.mulf %172, %155 : vector<1x64xf32>
    %182 = arith.mulf %166, %180 : vector<1x64xf32>
    %183 = arith.addf %181, %182 : vector<1x64xf32>
    %184 = math.tanh %183 : vector<1x64xf32>
    %185 = arith.mulf %178, %184 : vector<1x64xf32>
    %c3_65 = arith.constant 3 : index
    %c0_66 = arith.constant 0 : index
    %186 = vector.load %arg8[%c3_65, %c0_66] : memref<8x64xf32, #tpu.memory_space<vmem>>, vector<1x64xf32>
    tpu.vector_store %arg8[%c3_65, %c0_66], %185 {strides = array<i32>} : memref<8x64xf32, #tpu.memory_space<vmem>>, vector<1x64xf32>,
    %cst_67 = arith.constant dense<0.000000e+00> : vector<1x512xf32>
    %187 = tpu.matmul %185, %0, %cst_67 {dimension_numbers = #tpu.dot_dimension_numbers<[1], [0], [0], [1], [0, 0, 1, 1], [], []>} : vector<1x64xf32>, vector<64x512xf32>, vector<1x512xf32> -> vector<1x512xf32>
    %188 = arith.addf %45, %187 : vector<1x512xf32>
    %189 = vector.extract_strided_slice %188 {offsets = [0, 0], sizes = [1, 64], strides = [1, 1]} : vector<1x512xf32> to vector<1x64xf32>
    %190 = arith.negf %189 : vector<1x64xf32>
    %191 = math.exp %190 : vector<1x64xf32>
    %cst_68 = arith.constant 1.000000e+00 : f32
    %192 = vector.broadcast %cst_68 : f32 to vector<1x64xf32>
    %193 = arith.addf %192, %191 : vector<1x64xf32>
    %194 = arith.divf %192, %193 : vector<1x64xf32>
    %195 = vector.extract_strided_slice %188 {offsets = [0, 128], sizes = [1, 64], strides = [1, 1]} : vector<1x512xf32> to vector<1x64xf32>
    %196 = arith.negf %195 : vector<1x64xf32>
    %197 = math.exp %196 : vector<1x64xf32>
    %cst_69 = arith.constant 1.000000e+00 : f32
    %198 = vector.broadcast %cst_69 : f32 to vector<1x64xf32>
    %199 = arith.addf %198, %197 : vector<1x64xf32>
    %200 = arith.divf %198, %199 : vector<1x64xf32>
    %201 = vector.extract_strided_slice %188 {offsets = [0, 256], sizes = [1, 64], strides = [1, 1]} : vector<1x512xf32> to vector<1x64xf32>
    %202 = arith.negf %201 : vector<1x64xf32>
    %203 = math.exp %202 : vector<1x64xf32>
    %cst_70 = arith.constant 1.000000e+00 : f32
    %204 = vector.broadcast %cst_70 : f32 to vector<1x64xf32>
    %205 = arith.addf %204, %203 : vector<1x64xf32>
    %206 = arith.divf %204, %205 : vector<1x64xf32>
    %207 = vector.extract_strided_slice %188 {offsets = [0, 384], sizes = [1, 64], strides = [1, 1]} : vector<1x512xf32> to vector<1x64xf32>
    %208 = math.tanh %207 : vector<1x64xf32>
    %209 = arith.mulf %200, %183 : vector<1x64xf32>
    %210 = arith.mulf %194, %208 : vector<1x64xf32>
    %211 = arith.addf %209, %210 : vector<1x64xf32>
    %212 = math.tanh %211 : vector<1x64xf32>
    %213 = arith.mulf %206, %212 : vector<1x64xf32>
    %c4_71 = arith.constant 4 : index
    %c0_72 = arith.constant 0 : index
    %214 = vector.load %arg8[%c4_71, %c0_72] : memref<8x64xf32, #tpu.memory_space<vmem>>, vector<1x64xf32>
    tpu.vector_store %arg8[%c4_71, %c0_72], %213 {strides = array<i32>} : memref<8x64xf32, #tpu.memory_space<vmem>>, vector<1x64xf32>,
    %cst_73 = arith.constant dense<0.000000e+00> : vector<1x512xf32>
    %215 = tpu.matmul %213, %0, %cst_73 {dimension_numbers = #tpu.dot_dimension_numbers<[1], [0], [0], [1], [0, 0, 1, 1], [], []>} : vector<1x64xf32>, vector<64x512xf32>, vector<1x512xf32> -> vector<1x512xf32>
    %216 = arith.addf %54, %215 : vector<1x512xf32>
    %217 = vector.extract_strided_slice %216 {offsets = [0, 0], sizes = [1, 64], strides = [1, 1]} : vector<1x512xf32> to vector<1x64xf32>
    %218 = arith.negf %217 : vector<1x64xf32>
    %219 = math.exp %218 : vector<1x64xf32>
    %cst_74 = arith.constant 1.000000e+00 : f32
    %220 = vector.broadcast %cst_74 : f32 to vector<1x64xf32>
    %221 = arith.addf %220, %219 : vector<1x64xf32>
    %222 = arith.divf %220, %221 : vector<1x64xf32>
    %223 = vector.extract_strided_slice %216 {offsets = [0, 128], sizes = [1, 64], strides = [1, 1]} : vector<1x512xf32> to vector<1x64xf32>
    %224 = arith.negf %223 : vector<1x64xf32>
    %225 = math.exp %224 : vector<1x64xf32>
    %cst_75 = arith.constant 1.000000e+00 : f32
    %226 = vector.broadcast %cst_75 : f32 to vector<1x64xf32>
    %227 = arith.addf %226, %225 : vector<1x64xf32>
    %228 = arith.divf %226, %227 : vector<1x64xf32>
    %229 = vector.extract_strided_slice %216 {offsets = [0, 256], sizes = [1, 64], strides = [1, 1]} : vector<1x512xf32> to vector<1x64xf32>
    %230 = arith.negf %229 : vector<1x64xf32>
    %231 = math.exp %230 : vector<1x64xf32>
    %cst_76 = arith.constant 1.000000e+00 : f32
    %232 = vector.broadcast %cst_76 : f32 to vector<1x64xf32>
    %233 = arith.addf %232, %231 : vector<1x64xf32>
    %234 = arith.divf %232, %233 : vector<1x64xf32>
    %235 = vector.extract_strided_slice %216 {offsets = [0, 384], sizes = [1, 64], strides = [1, 1]} : vector<1x512xf32> to vector<1x64xf32>
    %236 = math.tanh %235 : vector<1x64xf32>
    %237 = arith.mulf %228, %211 : vector<1x64xf32>
    %238 = arith.mulf %222, %236 : vector<1x64xf32>
    %239 = arith.addf %237, %238 : vector<1x64xf32>
    %240 = math.tanh %239 : vector<1x64xf32>
    %241 = arith.mulf %234, %240 : vector<1x64xf32>
    %c5_77 = arith.constant 5 : index
    %c0_78 = arith.constant 0 : index
    %242 = vector.load %arg8[%c5_77, %c0_78] : memref<8x64xf32, #tpu.memory_space<vmem>>, vector<1x64xf32>
    tpu.vector_store %arg8[%c5_77, %c0_78], %241 {strides = array<i32>} : memref<8x64xf32, #tpu.memory_space<vmem>>, vector<1x64xf32>,
    %cst_79 = arith.constant dense<0.000000e+00> : vector<1x512xf32>
    %243 = tpu.matmul %241, %0, %cst_79 {dimension_numbers = #tpu.dot_dimension_numbers<[1], [0], [0], [1], [0, 0, 1, 1], [], []>} : vector<1x64xf32>, vector<64x512xf32>, vector<1x512xf32> -> vector<1x512xf32>
    %244 = arith.addf %63, %243 : vector<1x512xf32>
    %245 = vector.extract_strided_slice %244 {offsets = [0, 0], sizes = [1, 64], strides = [1, 1]} : vector<1x512xf32> to vector<1x64xf32>
    %246 = arith.negf %245 : vector<1x64xf32>
    %247 = math.exp %246 : vector<1x64xf32>
    %cst_80 = arith.constant 1.000000e+00 : f32
    %248 = vector.broadcast %cst_80 : f32 to vector<1x64xf32>
    %249 = arith.addf %248, %247 : vector<1x64xf32>
    %250 = arith.divf %248, %249 : vector<1x64xf32>
    %251 = vector.extract_strided_slice %244 {offsets = [0, 128], sizes = [1, 64], strides = [1, 1]} : vector<1x512xf32> to vector<1x64xf32>
    %252 = arith.negf %251 : vector<1x64xf32>
    %253 = math.exp %252 : vector<1x64xf32>
    %cst_81 = arith.constant 1.000000e+00 : f32
    %254 = vector.broadcast %cst_81 : f32 to vector<1x64xf32>
    %255 = arith.addf %254, %253 : vector<1x64xf32>
    %256 = arith.divf %254, %255 : vector<1x64xf32>
    %257 = vector.extract_strided_slice %244 {offsets = [0, 256], sizes = [1, 64], strides = [1, 1]} : vector<1x512xf32> to vector<1x64xf32>
    %258 = arith.negf %257 : vector<1x64xf32>
    %259 = math.exp %258 : vector<1x64xf32>
    %cst_82 = arith.constant 1.000000e+00 : f32
    %260 = vector.broadcast %cst_82 : f32 to vector<1x64xf32>
    %261 = arith.addf %260, %259 : vector<1x64xf32>
    %262 = arith.divf %260, %261 : vector<1x64xf32>
    %263 = vector.extract_strided_slice %244 {offsets = [0, 384], sizes = [1, 64], strides = [1, 1]} : vector<1x512xf32> to vector<1x64xf32>
    %264 = math.tanh %263 : vector<1x64xf32>
    %265 = arith.mulf %256, %239 : vector<1x64xf32>
    %266 = arith.mulf %250, %264 : vector<1x64xf32>
    %267 = arith.addf %265, %266 : vector<1x64xf32>
    %268 = math.tanh %267 : vector<1x64xf32>
    %269 = arith.mulf %262, %268 : vector<1x64xf32>
    %c6_83 = arith.constant 6 : index
    %c0_84 = arith.constant 0 : index
    %270 = vector.load %arg8[%c6_83, %c0_84] : memref<8x64xf32, #tpu.memory_space<vmem>>, vector<1x64xf32>
    tpu.vector_store %arg8[%c6_83, %c0_84], %269 {strides = array<i32>} : memref<8x64xf32, #tpu.memory_space<vmem>>, vector<1x64xf32>,
    %cst_85 = arith.constant dense<0.000000e+00> : vector<1x512xf32>
    %271 = tpu.matmul %269, %0, %cst_85 {dimension_numbers = #tpu.dot_dimension_numbers<[1], [0], [0], [1], [0, 0, 1, 1], [], []>} : vector<1x64xf32>, vector<64x512xf32>, vector<1x512xf32> -> vector<1x512xf32>
    %272 = arith.addf %72, %271 : vector<1x512xf32>
    %273 = vector.extract_strided_slice %272 {offsets = [0, 0], sizes = [1, 64], strides = [1, 1]} : vector<1x512xf32> to vector<1x64xf32>
    %274 = arith.negf %273 : vector<1x64xf32>
    %275 = math.exp %274 : vector<1x64xf32>
    %cst_86 = arith.constant 1.000000e+00 : f32
    %276 = vector.broadcast %cst_86 : f32 to vector<1x64xf32>
    %277 = arith.addf %276, %275 : vector<1x64xf32>
    %278 = arith.divf %276, %277 : vector<1x64xf32>
    %279 = vector.extract_strided_slice %272 {offsets = [0, 128], sizes = [1, 64], strides = [1, 1]} : vector<1x512xf32> to vector<1x64xf32>
    %280 = arith.negf %279 : vector<1x64xf32>
    %281 = math.exp %280 : vector<1x64xf32>
    %cst_87 = arith.constant 1.000000e+00 : f32
    %282 = vector.broadcast %cst_87 : f32 to vector<1x64xf32>
    %283 = arith.addf %282, %281 : vector<1x64xf32>
    %284 = arith.divf %282, %283 : vector<1x64xf32>
    %285 = vector.extract_strided_slice %272 {offsets = [0, 256], sizes = [1, 64], strides = [1, 1]} : vector<1x512xf32> to vector<1x64xf32>
    %286 = arith.negf %285 : vector<1x64xf32>
    %287 = math.exp %286 : vector<1x64xf32>
    %cst_88 = arith.constant 1.000000e+00 : f32
    %288 = vector.broadcast %cst_88 : f32 to vector<1x64xf32>
    %289 = arith.addf %288, %287 : vector<1x64xf32>
    %290 = arith.divf %288, %289 : vector<1x64xf32>
    %291 = vector.extract_strided_slice %272 {offsets = [0, 384], sizes = [1, 64], strides = [1, 1]} : vector<1x512xf32> to vector<1x64xf32>
    %292 = math.tanh %291 : vector<1x64xf32>
    %293 = arith.mulf %284, %267 : vector<1x64xf32>
    %294 = arith.mulf %278, %292 : vector<1x64xf32>
    %295 = arith.addf %293, %294 : vector<1x64xf32>
    %296 = math.tanh %295 : vector<1x64xf32>
    %297 = arith.mulf %290, %296 : vector<1x64xf32>
    %c7_89 = arith.constant 7 : index
    %c0_90 = arith.constant 0 : index
    %298 = vector.load %arg8[%c7_89, %c0_90] : memref<8x64xf32, #tpu.memory_space<vmem>>, vector<1x64xf32>
    tpu.vector_store %arg8[%c7_89, %c0_90], %297 {strides = array<i32>} : memref<8x64xf32, #tpu.memory_space<vmem>>, vector<1x64xf32>,
    %c0_91 = arith.constant 0 : index
    %c0_92 = arith.constant 0 : index
    %299 = vector.load %arg8[%c0_91, %c0_92] : memref<8x64xf32, #tpu.memory_space<vmem>>, vector<8x64xf32>
    %300 = vector.extract_strided_slice %299 {offsets = [0, 0], sizes = [8, 32], strides = [1, 1]} : vector<8x64xf32> to vector<8x32xf32>
    %301 = vector.extract_strided_slice %299 {offsets = [0, 32], sizes = [8, 32], strides = [1, 1]} : vector<8x64xf32> to vector<8x32xf32>
    %302 = tpu.iota {dimensions = array<i32: 0>} : vector<8x8xi32>
    %303 = tpu.iota {dimensions = array<i32: 1>} : vector<8x8xi32>
    %304 = arith.addi %302, %303 : vector<8x8xi32>
    %c7_i32 = arith.constant 7 : i32
    %305 = vector.broadcast %c7_i32 : i32 to vector<8x8xi32>
    %306 = arith.cmpi eq, %304, %305 : vector<8x8xi32>
    %cst_93 = arith.constant 1.000000e+00 : f32
    %cst_94 = arith.constant 0.000000e+00 : f32
    %307 = vector.broadcast %cst_93 : f32 to vector<8x8xf32>
    %308 = vector.broadcast %cst_94 : f32 to vector<8x8xf32>
    %309 = arith.select %306, %307, %308 : vector<8x8xi1>, vector<8x8xf32>
    %cst_95 = arith.constant dense<0.000000e+00> : vector<8x32xf32>
    %310 = tpu.matmul %309, %301, %cst_95 {dimension_numbers = #tpu.dot_dimension_numbers<[1], [0], [0], [1], [0, 0, 1, 1], [], []>} : vector<8x8xf32>, vector<8x32xf32>, vector<8x32xf32> -> vector<8x32xf32>
    %c0_96 = arith.constant 0 : index
    %c0_97 = arith.constant 0 : index
    %311 = vector.load %arg4[%c0_96, %c0_97] : memref<32x8xf32, #tpu.memory_space<vmem>>, vector<32x8xf32>
    %cst_98 = arith.constant dense<0.000000e+00> : vector<8x8xf32>
    %312 = tpu.matmul %300, %311, %cst_98 {dimension_numbers = #tpu.dot_dimension_numbers<[1], [0], [0], [1], [0, 0, 1, 1], [], []>} : vector<8x32xf32>, vector<32x8xf32>, vector<8x8xf32> -> vector<8x8xf32>
    %c0_99 = arith.constant 0 : index
    %c0_100 = arith.constant 0 : index
    %313 = vector.load %arg5[%c0_99, %c0_100] : memref<32x8xf32, #tpu.memory_space<vmem>>, vector<32x8xf32>
    %cst_101 = arith.constant dense<0.000000e+00> : vector<8x8xf32>
    %314 = tpu.matmul %310, %313, %cst_101 {dimension_numbers = #tpu.dot_dimension_numbers<[1], [0], [0], [1], [0, 0, 1, 1], [], []>} : vector<8x32xf32>, vector<32x8xf32>, vector<8x8xf32> -> vector<8x8xf32>
    %315 = arith.addf %312, %314 : vector<8x8xf32>
    %c0_102 = arith.constant 0 : index
    %c0_103 = arith.constant 0 : index
    %316 = vector.load %arg6[%c0_102, %c0_103] : memref<1x8xf32, #tpu.memory_space<vmem>>, vector<1x8xf32>
    %317 = vector.broadcast %316 : vector<1x8xf32> to vector<8x8xf32>
    %318 = arith.addf %315, %317 : vector<8x8xf32>
    %c0_104 = arith.constant 0 : index
    %c0_105 = arith.constant 0 : index
    %319 = vector.load %arg7[%c0_104, %c0_105] : memref<8x8xf32, #tpu.memory_space<vmem>>, vector<8x8xf32>
    tpu.vector_store %arg7[%c0_104, %c0_105], %318 {strides = array<i32>} : memref<8x8xf32, #tpu.memory_space<vmem>>, vector<8x8xf32>,
    return
  }
}

</mosaic_0001>

<llo_original>
// kernel: ner_forward.1
$region0: #{ner_forward.1}
  #allocation0 [shape = 'u32[]', space=smem, size = 0x4, offset = 0x4, fixed_abs, tag = 'smem constant byte address 0x4 - core index']
  #allocation1 [shape = 'u32[72,128]{1,0:T(1,128)}', space=vmem, size = 0x9000, scoped, tag = 'internal scratch']
  #allocation2 [shape = 'f32[8,64]{1,0:T(8,128)}', space=vmem, size = 0x1000, scoped, tag = 'scratch operand']
  %s0 = inlined_call_operand.vmem [shape: s32[8], index: 0, kind: input, shape index: {}]
  %s1 = inlined_call_operand.hbm [shape: f32[32,1,512], index: 1, kind: input, shape index: {}]
  %s2 = inlined_call_operand.hbm [shape: f32[32,1,512], index: 2, kind: input, shape index: {}]
  %s3 = inlined_call_operand.hbm [shape: f32[64,512], index: 3, kind: input, shape index: {}]
  %s4 = inlined_call_operand.vmem [shape: f32[32,8], index: 4, kind: input, shape index: {}]
  %s5 = inlined_call_operand.vmem [shape: f32[32,8], index: 5, kind: input, shape index: {}]
  %s6 = inlined_call_operand.vmem [shape: f32[1,8], index: 6, kind: input, shape index: {}]
  %s7 = inlined_call_operand.hbm [shape: f32[8,8], index: 7, kind: output, shape index: {}]
  %s8 = sld [smem:[#allocation0]]
  $region54: #{ner_forward.1} parent=0
    _
  %s10 = ssub.s32 1, %s8
  %s11 = scalar_select 0, %s10, %s8
  $region1: #{ner_forward.1} parent=0
    #allocation3 [shape = 'u8[512]{0}', space=smem, size = 0x200, scoped, tag = 'input window, operand 0, single buffered']
    #allocation4 [shape = 's32[1]{0}', space=sflag, size = 0x4, scoped, tag = 'scoped memory for ner_forward.1']
    #allocation5 [shape = 's32[1]{0}', space=sflag, size = 0x4, scoped, tag = 'scoped memory for ner_forward.1']
    #allocation6 [shape = 's32[1]{0}', space=sflag, size = 0x4, scoped, tag = 'scoped memory for ner_forward.1']
    #allocation7 [shape = 'u8[65536]{0}', space=vmem, size = 0x10000, scoped, tag = 'input window, operand 1, single buffered']
    #allocation8 [shape = 'u8[65536]{0}', space=vmem, size = 0x10000, scoped, tag = 'input window, operand 2, single buffered']
    #allocation9 [shape = 's32[1]{0}', space=sflag, size = 0x4, scoped, tag = 'scoped memory for ner_forward.1']
    #allocation10 [shape = 'u8[131072]{0}', space=vmem, size = 0x20000, scoped, tag = 'input window, operand 3, single buffered']
    #allocation11 [shape = 'u8[4096]{0}', space=vmem, size = 0x1000, scoped, tag = 'output window, operand 0, single buffered']
    %12 = vsyncpa [#allocation6], 0
    %13 = vsyncpa [#allocation4], 0
    %14 = vsyncpa [#allocation9], 0
    %15 = vsyncpa [#allocation5], 0
    // Predicated region
    $region2: #{ner_forward.1} parent=1 // pred_check
      _
    $region3: #{ner_forward.1} parent=1 // pred_check_branch
      %17 = sbr.rel (0) target = $region5
    $region4: #{ner_forward.1} parent=1 // pred_region
      %19 = vsyncadd [#allocation6], 0
      %s21 = sshll.u32 %s0, 4
      %s22 = int_to_ptr.vmem [resolvable:$true] %s21
      %24 = dma.vmem_to_smem %s22, 16, [#allocation3], [#allocation6]
    $region5: #{ner_forward.1} parent=1 // pred_fallthru
      _
    // Predicated region
    $region6: #{ner_forward.1} parent=1 // pred_check
      _
    $region7: #{ner_forward.1} parent=1 // pred_check_branch
      %26 = sbr.rel (0) target = $region9
    $region8: #{ner_forward.1} parent=1 // pred_region
      %28 = vsyncadd [#allocation4], 0
      %s29 = sshll.u32 %s1, 4
      %s30 = int_to_ptr.hbm [resolvable:$true] %s29
      %s31 = sshll.u32 [#allocation7], 4
      %s32 = int_to_ptr.vmem [resolvable:$true] %s31
      %37 = dma.hbm_to_vmem [thread:$0]  %s30, 2048, %s32, [#allocation4], 64, 64, 4
    $region9: #{ner_forward.1} parent=1 // pred_fallthru
      _
    // Predicated region
    $region10: #{ner_forward.1} parent=1 // pred_check
      _
    $region11: #{ner_forward.1} parent=1 // pred_check_branch
      %39 = sbr.rel (0) target = $region13
    $region12: #{ner_forward.1} parent=1 // pred_region
      %41 = vsyncadd [#allocation9], 0
      %s42 = sshll.u32 %s2, 4
      %s43 = int_to_ptr.hbm [resolvable:$true] %s42
      %s44 = sshll.u32 [#allocation8], 4
      %s45 = int_to_ptr.vmem [resolvable:$true] %s44
      %50 = dma.hbm_to_vmem [thread:$0]  %s43, 2048, %s45, [#allocation9], 64, 64, 4
    $region13: #{ner_forward.1} parent=1 // pred_fallthru
      _
    // Predicated region
    $region14: #{ner_forward.1} parent=1 // pred_check
      _
    $region15: #{ner_forward.1} parent=1 // pred_check_branch
      %52 = sbr.rel (0) target = $region17
    $region16: #{ner_forward.1} parent=1 // pred_region
      %54 = vsyncadd [#allocation9], 0
      %s55 = sshll.u32 %s3, 4
      %s56 = int_to_ptr.hbm [resolvable:$true] %s55
      %s57 = sshll.u32 [#allocation10], 4
      %s58 = int_to_ptr.vmem [resolvable:$true] %s57
      %63 = dma.hbm_to_vmem [thread:$0]  %s56, 4096, %s58, [#allocation9], 512, 512, 32
    $region17: #{ner_forward.1} parent=1 // pred_fallthru
      _
    // Predicated region
    $region18: #{ner_forward.1} parent=1 // pred_check
      _
    $region19: #{ner_forward.1} parent=1 // pred_check_branch
      %65 = sbr.rel (0) target = $region21
    $region20: #{ner_forward.1} parent=1 // pred_region
      _
    $region21: #{ner_forward.1} parent=1 // pred_fallthru
      _
    // Predicated region
    $region22: #{ner_forward.1} parent=1 // pred_check
      _
    $region23: #{ner_forward.1} parent=1 // pred_check_branch
      %67 = sbr.rel (0) target = $region25
    $region24: #{ner_forward.1} parent=1 // pred_region
      _
    $region25: #{ner_forward.1} parent=1 // pred_fallthru
      _
    // Predicated region
    $region26: #{ner_forward.1} parent=1 // pred_check
      _
    $region27: #{ner_forward.1} parent=1 // pred_check_branch
      %69 = sbr.rel (0) target = $region29
    $region28: #{ner_forward.1} parent=1 // pred_region
      _
    $region29: #{ner_forward.1} parent=1 // pred_fallthru
      _
    // Predicated region
    $region30: #{ner_forward.1} parent=1 // pred_check
      _
    $region31: #{ner_forward.1} parent=1 // pred_check_branch
      %71 = sbr.rel (0) target = $region33
    $region32: #{ner_forward.1} parent=1 // pred_region
      %73 = dma.done [#allocation6], 16
    $region33: #{ner_forward.1} parent=1 // pred_fallthru
      _
    // Predicated region
    $region34: #{ner_forward.1} parent=1 // pred_check
      _
    $region35: #{ner_forward.1} parent=1 // pred_check_branch
      %75 = sbr.rel (0) target = $region37
    $region36: #{ner_forward.1} parent=1 // pred_region
      %77 = dma.done [#allocation4], 2048
    $region37: #{ner_forward.1} parent=1 // pred_fallthru
      _
    // Predicated region
    $region38: #{ner_forward.1} parent=1 // pred_check
      _
    $region39: #{ner_forward.1} parent=1 // pred_check_branch
      %79 = sbr.rel (0) target = $region41
    $region40: #{ner_forward.1} parent=1 // pred_region
      %81 = dma.done [#allocation9], 2048
    $region41: #{ner_forward.1} parent=1 // pred_fallthru
      _
    // Predicated region
    $region42: #{ner_forward.1} parent=1 // pred_check
      _
    $region43: #{ner_forward.1} parent=1 // pred_check_branch
      %83 = sbr.rel (0) target = $region45
    $region44: #{ner_forward.1} parent=1 // pred_region
      %85 = dma.done [#allocation9], 4096
    $region45: #{ner_forward.1} parent=1 // pred_fallthru
      _
    %86 = sfence
    %v87 = vld [vmem:[#allocation10] sm:$0xff]
    %v88 = vld [vmem:[#allocation10 + $0x8] sm:$0xff]
    %v89 = vld [vmem:[#allocation10 + $0x10] sm:$0xff]
    %v90 = vld [vmem:[#allocation10 + $0x18] sm:$0xff]
    %v91 = vld [vmem:[#allocation10 + $0x20] sm:$0xff]
    %v92 = vld [vmem:[#allocation10 + $0x28] sm:$0xff]
    %v93 = vld [vmem:[#allocation10 + $0x30] sm:$0xff]
    %v94 = vld [vmem:[#allocation10 + $0x38] sm:$0xff]
    %v95 = vld [vmem:[#allocation10 + $0x40] sm:$0xff]
    %v96 = vld [vmem:[#allocation10 + $0x48] sm:$0xff]
    %v97 = vld [vmem:[#allocation10 + $0x50] sm:$0xff]
    %v98 = vld [vmem:[#allocation10 + $0x58] sm:$0xff]
    %v99 = vld [vmem:[#allocation10 + $0x60] sm:$0xff]
    %v100 = vld [vmem:[#allocation10 + $0x68] sm:$0xff]
    %v101 = vld [vmem:[#allocation10 + $0x70] sm:$0xff]
    %v102 = vld [vmem:[#allocation10 + $0x78] sm:$0xff]
    %v103 = vld [vmem:[#allocation10 + $0x80] sm:$0xff]
    %v104 = vld [vmem:[#allocation10 + $0x88] sm:$0xff]
    %v105 = vld [vmem:[#allocation10 + $0x90] sm:$0xff]
    %v106 = vld [vmem:[#allocation10 + $0x98] sm:$0xff]
    %v107 = vld [vmem:[#allocation10 + $0xa0] sm:$0xff]
    %v108 = vld [vmem:[#allocation10 + $0xa8] sm:$0xff]
    %v109 = vld [vmem:[#allocation10 + $0xb0] sm:$0xff]
    %v110 = vld [vmem:[#allocation10 + $0xb8] sm:$0xff]
    %v111 = vld [vmem:[#allocation10 + $0xc0] sm:$0xff]
    %v112 = vld [vmem:[#allocation10 + $0xc8] sm:$0xff]
    %v113 = vld [vmem:[#allocation10 + $0xd0] sm:$0xff]
    %v114 = vld [vmem:[#allocation10 + $0xd8] sm:$0xff]
    %v115 = vld [vmem:[#allocation10 + $0xe0] sm:$0xff]
    %v116 = vld [vmem:[#allocation10 + $0xe8] sm:$0xff]
    %v117 = vld [vmem:[#allocation10 + $0xf0] sm:$0xff]
    %v118 = vld [vmem:[#allocation10 + $0xf8] sm:$0xff]
    %s119 = sld [smem:[#allocation3]]
    %s120 = smul.u32 %s119, 4
    %s121 = scalar_lea.vmem [#allocation7], %s120
    %v122 = vld [vmem:[%s121] sm:$0xf]
    %s123 = sld [smem:[#allocation3 + $0x7]]
    %s124 = smul.u32 %s123, 4
    %s125 = scalar_lea.vmem [#allocation8], %s124
    %v126 = vld [vmem:[%s125] sm:$0xf]
    %v127 = vadd.f32 %v122, %v126
    %s128 = sld [smem:[#allocation3 + $0x1]]
    %s129 = smul.u32 %s128, 4
    %s130 = scalar_lea.vmem [#allocation7], %s129
    %v131 = vld [vmem:[%s130] sm:$0xf]
    %s132 = sld [smem:[#allocation3 + $0x6]]
    %s133 = smul.u32 %s132, 4
    %s134 = scalar_lea.vmem [#allocation8], %s133
    %v135 = vld [vmem:[%s134] sm:$0xf]
    %v136 = vadd.f32 %v131, %v135
    %s137 = sld [smem:[#allocation3 + $0x2]]
    %s138 = smul.u32 %s137, 4
    %s139 = scalar_lea.vmem [#allocation7], %s138
    %v140 = vld [vmem:[%s139] sm:$0xf]
    %s141 = sld [smem:[#allocation3 + $0x5]]
    %s142 = smul.u32 %s141, 4
    %s143 = scalar_lea.vmem [#allocation8], %s142
    %v144 = vld [vmem:[%s143] sm:$0xf]
    %v145 = vadd.f32 %v140, %v144
    %s146 = sld [smem:[#allocation3 + $0x3]]
    %s147 = smul.u32 %s146, 4
    %s148 = scalar_lea.vmem [#allocation7], %s147
    %v149 = vld [vmem:[%s148] sm:$0xf]
    %s150 = sld [smem:[#allocation3 + $0x4]]
    %s151 = smul.u32 %s150, 4
    %s152 = scalar_lea.vmem [#allocation8], %s151
    %v153 = vld [vmem:[%s152] sm:$0xf]
    %v154 = vadd.f32 %v149, %v153
    %s155 = scalar_lea.vmem [#allocation7], %s151
    %v156 = vld [vmem:[%s155] sm:$0xf]
    %s157 = scalar_lea.vmem [#allocation8], %s147
    %v158 = vld [vmem:[%s157] sm:$0xf]
    %v159 = vadd.f32 %v156, %v158
    %s160 = scalar_lea.vmem [#allocation7], %s142
    %v161 = vld [vmem:[%s160] sm:$0xf]
    %s162 = scalar_lea.vmem [#allocation8], %s138
    %v163 = vld [vmem:[%s162] sm:$0xf]
    %v164 = vadd.f32 %v161, %v163
    %s165 = scalar_lea.vmem [#allocation7], %s133
    %v166 = vld [vmem:[%s165] sm:$0xf]
    %s167 = scalar_lea.vmem [#allocation8], %s129
    %v168 = vld [vmem:[%s167] sm:$0xf]
    %v169 = vadd.f32 %v166, %v168
    %s170 = scalar_lea.vmem [#allocation7], %s124
    %v171 = vld [vmem:[%s170] sm:$0xf]
    %s172 = scalar_lea.vmem [#allocation8], %s120
    %v173 = vld [vmem:[%s172] sm:$0xf]
    %v174 = vadd.f32 %v171, %v173
    %vm175 = vcmask 523264
    %v177 = vsel %vm175, 0.0, 0
    %179 = vmatpush.msra.mxu0 0.0
    %180 = vmatpush.msra.mxu0 0.0
    %181 = vmatpush.msra.mxu0 0.0
    %182 = vmatpush.msra.mxu0 0.0
    %183 = vmatpush.msra.mxu0 0.0
    %184 = vmatpush.msra.mxu0 0.0
    %185 = vmatpush.msra.mxu0 0.0
    %186 = vmatpush.msra.mxu0 0.0
    %187 = vmatpush.msra.mxu0 %v115
    %188 = vmatpush.msra.mxu0 %v111
    %189 = vmatpush.msra.mxu0 %v107
    %190 = vmatpush.msra.mxu0 %v103
    %191 = vmatpush.msra.mxu0 %v99
    %192 = vmatpush.msra.mxu0 %v95
    %193 = vmatpush.msra.mxu0 %v91
    %194 = vmatpush.msra.mxu0 %v87
    %195 = vmatmul.f32.gmra.mxu0 %v177
    %v196 = vpop.f32.mrf.mxu0
    %v197 = vadd.f32 0.0, %v196
    %198 = vdwg.mxu0
    %199 = vmatpush.msra.mxu0 0.0
    %200 = vmatpush.msra.mxu0 0.0
    %201 = vmatpush.msra.mxu0 0.0
    %202 = vmatpush.msra.mxu0 0.0
    %203 = vmatpush.msra.mxu0 0.0
    %204 = vmatpush.msra.mxu0 0.0
    %205 = vmatpush.msra.mxu0 0.0
    %206 = vmatpush.msra.mxu0 0.0
    %207 = vmatpush.msra.mxu0 %v116
    %208 = vmatpush.msra.mxu0 %v112
    %209 = vmatpush.msra.mxu0 %v108
    %210 = vmatpush.msra.mxu0 %v104
    %211 = vmatpush.msra.mxu0 %v100
    %212 = vmatpush.msra.mxu0 %v96
    %213 = vmatpush.msra.mxu0 %v92
    %214 = vmatpush.msra.mxu0 %v88
    %215 = vmatmul.f32.gmra.mxu0 %v177
    %v216 = vpop.f32.mrf.mxu0
    %v217 = vadd.f32 0.0, %v216
    %218 = vdwg.mxu0
    %219 = vmatpush.msra.mxu0 0.0
    %220 = vmatpush.msra.mxu0 0.0
    %221 = vmatpush.msra.mxu0 0.0
    %222 = vmatpush.msra.mxu0 0.0
    %223 = vmatpush.msra.mxu0 0.0
    %224 = vmatpush.msra.mxu0 0.0
    %225 = vmatpush.msra.mxu0 0.0
    %226 = vmatpush.msra.mxu0 0.0
    %227 = vmatpush.msra.mxu0 %v117
    %228 = vmatpush.msra.mxu0 %v113
    %229 = vmatpush.msra.mxu0 %v109
    %230 = vmatpush.msra.mxu0 %v105
    %231 = vmatpush.msra.mxu0 %v101
    %232 = vmatpush.msra.mxu0 %v97
    %233 = vmatpush.msra.mxu0 %v93
    %234 = vmatpush.msra.mxu0 %v89
    %235 = vmatmul.f32.gmra.mxu0 %v177
    %v236 = vpop.f32.mrf.mxu0
    %v237 = vadd.f32 0.0, %v236
    %238 = vdwg.mxu0
    %239 = vmatpush.msra.mxu0 0.0
    %240 = vmatpush.msra.mxu0 0.0
    %241 = vmatpush.msra.mxu0 0.0
    %242 = vmatpush.msra.mxu0 0.0
    %243 = vmatpush.msra.mxu0 0.0
    %244 = vmatpush.msra.mxu0 0.0
    %245 = vmatpush.msra.mxu0 0.0
    %246 = vmatpush.msra.mxu0 0.0
    %247 = vmatpush.msra.mxu0 %v118
    %248 = vmatpush.msra.mxu0 %v114
    %249 = vmatpush.msra.mxu0 %v110
    %250 = vmatpush.msra.mxu0 %v106
    %251 = vmatpush.msra.mxu0 %v102
    %252 = vmatpush.msra.mxu0 %v98
    %253 = vmatpush.msra.mxu0 %v94
    %254 = vmatpush.msra.mxu0 %v90
    %255 = vmatmul.f32.gmra.mxu0 %v177
    %v256 = vpop.f32.mrf.mxu0
    %v257 = vadd.f32 0.0, %v256
    %258 = vdwg.mxu0
    %v263 = vrot.slane %v217, 7
    %v264 = vrot.slane %v237, 6
    %v265 = vrot.slane %v257, 5
    %vm266 = vcmask 1040384
    %v267 = vsel %vm266, %v197, %v263
    %vm268 = vcmask 1042434
    %v269 = vsel %vm268, %v264, %v265
    %vm270 = vcmask 1041408
    %v271 = vsel %vm270, %v267, %v269
    %v273 = vadd.f32 %v127, %v271
    %v274 = vxor.u32 %v273, 2147483648
    %v275 = vmul.f32 %v274, 1.442695
    %v276 = vpow.pop %v275
    %v277 = vadd.f32 %v276, 1.0
    %v278 = vrcp.pop %v277
    %v279 = vmul.f32 %v277, %v278
    %v280 = vsub.f32 1.0, %v279
    %v281 = vmul.f32 %v278, %v280
    %v282 = vadd.f32 %v278, %v281
    %vm283 = vweird.f32 %v277
    %vm284 = vweird.f32 %v278
    %vm285 = vmor %vm283, %vm284
    %v286 = vsel %vm285, %v278, %v282
    %v287 = vand.u32 2147483647, %v277
    %vm288 = vcmp.eq.f32.partialorder %v287, 8.507059e+37
    %v289 = vand.u32 %v277, 2147483648
    %v290 = vor.u32 1.1754944e-38, %v289
    %v291 = vsel %vm288, %v290, %v286
    %v292 = vmul.f32 1.0, %v291
    %v294 = vrot.slane %v273, 1
    %v296 = vxor.u32 %v294, 2147483648
    %v297 = vmul.f32 %v296, 1.442695
    %v298 = vpow.pop %v297
    %v299 = vadd.f32 %v298, 1.0
    %v300 = vrcp.pop %v299
    %v301 = vmul.f32 %v299, %v300
    %v302 = vsub.f32 1.0, %v301
    %v303 = vmul.f32 %v300, %v302
    %v304 = vadd.f32 %v300, %v303
    %vm305 = vweird.f32 %v299
    %vm306 = vweird.f32 %v300
    %vm307 = vmor %vm305, %vm306
    %v308 = vsel %vm307, %v300, %v304
    %v309 = vand.u32 2147483647, %v299
    %vm310 = vcmp.eq.f32.partialorder %v309, 8.507059e+37
    %v311 = vand.u32 %v299, 2147483648
    %v312 = vor.u32 1.1754944e-38, %v311
    %v313 = vsel %vm310, %v312, %v308
    %v314 = vmul.f32 1.0, %v313
    %v315 = vrot.slane %v273, 2
    %v317 = vxor.u32 %v315, 2147483648
    %v318 = vmul.f32 %v317, 1.442695
    %v319 = vpow.pop %v318
    %v320 = vadd.f32 %v319, 1.0
    %v321 = vrcp.pop %v320
    %v322 = vmul.f32 %v320, %v321
    %v323 = vsub.f32 1.0, %v322
    %v324 = vmul.f32 %v321, %v323
    %v325 = vadd.f32 %v321, %v324
    %vm326 = vweird.f32 %v320
    %vm327 = vweird.f32 %v321
    %vm328 = vmor %vm326, %vm327
    %v329 = vsel %vm328, %v321, %v325
    %v330 = vand.u32 2147483647, %v320
    %vm331 = vcmp.eq.f32.partialorder %v330, 8.507059e+37
    %v332 = vand.u32 %v320, 2147483648
    %v333 = vor.u32 1.1754944e-38, %v332
    %v334 = vsel %vm331, %v333, %v329
    %v335 = vmul.f32 1.0, %v334
    %v336 = vrot.slane %v273, 3
    %v338 = vtanh.pop %v336
    %v339 = vmul.f32 %v314, 0.0
    %v340 = vmul.f32 %v292, %v338
    %v341 = vadd.f32 %v339, %v340
    %v342 = vtanh.pop %v341
    %v343 = vmul.f32 %v335, %v342
    %vm344 = vcmask 516096
    %345 = vst.msk [vmem:[#allocation2] sm:$0x1] %vm344, %v343
    %v347 = vsel %vm175, %v343, 0
    %349 = vmatpush.msra.mxu0 0.0
    %350 = vmatpush.msra.mxu0 0.0
    %351 = vmatpush.msra.mxu0 0.0
    %352 = vmatpush.msra.mxu0 0.0
    %353 = vmatpush.msra.mxu0 0.0
    %354 = vmatpush.msra.mxu0 0.0
    %355 = vmatpush.msra.mxu0 0.0
    %356 = vmatpush.msra.mxu0 0.0
    %357 = vmatpush.msra.mxu0 %v115
    %358 = vmatpush.msra.mxu0 %v111
    %359 = vmatpush.msra.mxu0 %v107
    %360 = vmatpush.msra.mxu0 %v103
    %361 = vmatpush.msra.mxu0 %v99
    %362 = vmatpush.msra.mxu0 %v95
    %363 = vmatpush.msra.mxu0 %v91
    %364 = vmatpush.msra.mxu0 %v87
    %365 = vmatmul.f32.gmra.mxu0 %v347
    %v366 = vpop.f32.mrf.mxu0
    %v367 = vadd.f32 0.0, %v366
    %368 = vdwg.mxu0
    %369 = vmatpush.msra.mxu0 0.0
    %370 = vmatpush.msra.mxu0 0.0
    %371 = vmatpush.msra.mxu0 0.0
    %372 = vmatpush.msra.mxu0 0.0
    %373 = vmatpush.msra.mxu0 0.0
    %374 = vmatpush.msra.mxu0 0.0
    %375 = vmatpush.msra.mxu0 0.0
    %376 = vmatpush.msra.mxu0 0.0
    %377 = vmatpush.msra.mxu0 %v116
    %378 = vmatpush.msra.mxu0 %v112
    %379 = vmatpush.msra.mxu0 %v108
    %380 = vmatpush.msra.mxu0 %v104
    %381 = vmatpush.msra.mxu0 %v100
    %382 = vmatpush.msra.mxu0 %v96
    %383 = vmatpush.msra.mxu0 %v92
    %384 = vmatpush.msra.mxu0 %v88
    %385 = vmatmul.f32.gmra.mxu0 %v347
    %v386 = vpop.f32.mrf.mxu0
    %v387 = vadd.f32 0.0, %v386
    %388 = vdwg.mxu0
    %389 = vmatpush.msra.mxu0 0.0
    %390 = vmatpush.msra.mxu0 0.0
    %391 = vmatpush.msra.mxu0 0.0
    %392 = vmatpush.msra.mxu0 0.0
    %393 = vmatpush.msra.mxu0 0.0
    %394 = vmatpush.msra.mxu0 0.0
    %395 = vmatpush.msra.mxu0 0.0
    %396 = vmatpush.msra.mxu0 0.0
    %397 = vmatpush.msra.mxu0 %v117
    %398 = vmatpush.msra.mxu0 %v113
    %399 = vmatpush.msra.mxu0 %v109
    %400 = vmatpush.msra.mxu0 %v105
    %401 = vmatpush.msra.mxu0 %v101
    %402 = vmatpush.msra.mxu0 %v97
    %403 = vmatpush.msra.mxu0 %v93
    %404 = vmatpush.msra.mxu0 %v89
    %405 = vmatmul.f32.gmra.mxu0 %v347
    %v406 = vpop.f32.mrf.mxu0
    %v407 = vadd.f32 0.0, %v406
    %408 = vdwg.mxu0
    %409 = vmatpush.msra.mxu0 0.0
    %410 = vmatpush.msra.mxu0 0.0
    %411 = vmatpush.msra.mxu0 0.0
    %412 = vmatpush.msra.mxu0 0.0
    %413 = vmatpush.msra.mxu0 0.0
    %414 = vmatpush.msra.mxu0 0.0
    %415 = vmatpush.msra.mxu0 0.0
    %416 = vmatpush.msra.mxu0 0.0
    %417 = vmatpush.msra.mxu0 %v118
    %418 = vmatpush.msra.mxu0 %v114
    %419 = vmatpush.msra.mxu0 %v110
    %420 = vmatpush.msra.mxu0 %v106
    %421 = vmatpush.msra.mxu0 %v102
    %422 = vmatpush.msra.mxu0 %v98
    %423 = vmatpush.msra.mxu0 %v94
    %424 = vmatpush.msra.mxu0 %v90
    %425 = vmatmul.f32.gmra.mxu0 %v347
    %v426 = vpop.f32.mrf.mxu0
    %v427 = vadd.f32 0.0, %v426
    %428 = vdwg.mxu0
    %v433 = vrot.slane %v387, 7
    %v434 = vrot.slane %v407, 6
    %v435 = vrot.slane %v427, 5
    %v436 = vsel %vm266, %v367, %v433
    %v437 = vsel %vm268, %v434, %v435
    %v438 = vsel %vm270, %v436, %v437
    %v440 = vadd.f32 %v136, %v438
    %v441 = vxor.u32 %v440, 2147483648
    %v442 = vmul.f32 %v441, 1.442695
    %v443 = vpow.pop %v442
    %v444 = vadd.f32 %v443, 1.0
    %v445 = vrcp.pop %v444
    %v446 = vmul.f32 %v444, %v445
    %v447 = vsub.f32 1.0, %v446
    %v448 = vmul.f32 %v445, %v447
    %v449 = vadd.f32 %v445, %v448
    %vm450 = vweird.f32 %v444
    %vm451 = vweird.f32 %v445
    %vm452 = vmor %vm450, %vm451
    %v453 = vsel %vm452, %v445, %v449
    %v454 = vand.u32 2147483647, %v444
    %vm455 = vcmp.eq.f32.partialorder %v454, 8.507059e+37
    %v456 = vand.u32 %v444, 2147483648
    %v457 = vor.u32 1.1754944e-38, %v456
    %v458 = vsel %vm455, %v457, %v453
    %v459 = vmul.f32 1.0, %v458
    %v461 = vrot.slane %v440, 1
    %v463 = vxor.u32 %v461, 2147483648
    %v464 = vmul.f32 %v463, 1.442695
    %v465 = vpow.pop %v464
    %v466 = vadd.f32 %v465, 1.0
    %v467 = vrcp.pop %v466
    %v468 = vmul.f32 %v466, %v467
    %v469 = vsub.f32 1.0, %v468
    %v470 = vmul.f32 %v467, %v469
    %v471 = vadd.f32 %v467, %v470
    %vm472 = vweird.f32 %v466
    %vm473 = vweird.f32 %v467
    %vm474 = vmor %vm472, %vm473
    %v475 = vsel %vm474, %v467, %v471
    %v476 = vand.u32 2147483647, %v466
    %vm477 = vcmp.eq.f32.partialorder %v476, 8.507059e+37
    %v478 = vand.u32 %v466, 2147483648
    %v479 = vor.u32 1.1754944e-38, %v478
    %v480 = vsel %vm477, %v479, %v475
    %v481 = vmul.f32 1.0, %v480
    %v482 = vrot.slane %v440, 2
    %v484 = vxor.u32 %v482, 2147483648
    %v485 = vmul.f32 %v484, 1.442695
    %v486 = vpow.pop %v485
    %v487 = vadd.f32 %v486, 1.0
    %v488 = vrcp.pop %v487
    %v489 = vmul.f32 %v487, %v488
    %v490 = vsub.f32 1.0, %v489
    %v491 = vmul.f32 %v488, %v490
    %v492 = vadd.f32 %v488, %v491
    %vm493 = vweird.f32 %v487
    %vm494 = vweird.f32 %v488
    %vm495 = vmor %vm493, %vm494
    %v496 = vsel %vm495, %v488, %v492
    %v497 = vand.u32 2147483647, %v487
    %vm498 = vcmp.eq.f32.partialorder %v497, 8.507059e+37
    %v499 = vand.u32 %v487, 2147483648
    %v500 = vor.u32 1.1754944e-38, %v499
    %v501 = vsel %vm498, %v500, %v496
    %v502 = vmul.f32 1.0, %v501
    %v503 = vrot.slane %v440, 3
    %v505 = vtanh.pop %v503
    %v506 = vmul.f32 %v481, %v341
    %v507 = vmul.f32 %v459, %v505
    %v508 = vadd.f32 %v506, %v507
    %v509 = vtanh.pop %v508
    %v510 = vmul.f32 %v502, %v509
    %511 = vst.msk [vmem:[#allocation2 + $0x1] sm:$0x1] %vm344, %v510
    %v513 = vsel %vm175, %v510, 0
    %515 = vmatpush.msra.mxu0 0.0
    %516 = vmatpush.msra.mxu0 0.0
    %517 = vmatpush.msra.mxu0 0.0
    %518 = vmatpush.msra.mxu0 0.0
    %519 = vmatpush.msra.mxu0 0.0
    %520 = vmatpush.msra.mxu0 0.0
    %521 = vmatpush.msra.mxu0 0.0
    %522 = vmatpush.msra.mxu0 0.0
    %523 = vmatpush.msra.mxu0 %v115
    %524 = vmatpush.msra.mxu0 %v111
    %525 = vmatpush.msra.mxu0 %v107
    %526 = vmatpush.msra.mxu0 %v103
    %527 = vmatpush.msra.mxu0 %v99
    %528 = vmatpush.msra.mxu0 %v95
    %529 = vmatpush.msra.mxu0 %v91
    %530 = vmatpush.msra.mxu0 %v87
    %531 = vmatmul.f32.gmra.mxu0 %v513
    %v532 = vpop.f32.mrf.mxu0
    %v533 = vadd.f32 0.0, %v532
    %534 = vdwg.mxu0
    %535 = vmatpush.msra.mxu0 0.0
    %536 = vmatpush.msra.mxu0 0.0
    %537 = vmatpush.msra.mxu0 0.0
    %538 = vmatpush.msra.mxu0 0.0
    %539 = vmatpush.msra.mxu0 0.0
    %540 = vmatpush.msra.mxu0 0.0
    %541 = vmatpush.msra.mxu0 0.0
    %542 = vmatpush.msra.mxu0 0.0
    %543 = vmatpush.msra.mxu0 %v116
    %544 = vmatpush.msra.mxu0 %v112
    %545 = vmatpush.msra.mxu0 %v108
    %546 = vmatpush.msra.mxu0 %v104
    %547 = vmatpush.msra.mxu0 %v100
    %548 = vmatpush.msra.mxu0 %v96
    %549 = vmatpush.msra.mxu0 %v92
    %550 = vmatpush.msra.mxu0 %v88
    %551 = vmatmul.f32.gmra.mxu0 %v513
    %v552 = vpop.f32.mrf.mxu0
    %v553 = vadd.f32 0.0, %v552
    %554 = vdwg.mxu0
    %555 = vmatpush.msra.mxu0 0.0
    %556 = vmatpush.msra.mxu0 0.0
    %557 = vmatpush.msra.mxu0 0.0
    %558 = vmatpush.msra.mxu0 0.0
    %559 = vmatpush.msra.mxu0 0.0
    %560 = vmatpush.msra.mxu0 0.0
    %561 = vmatpush.msra.mxu0 0.0
    %562 = vmatpush.msra.mxu0 0.0
    %563 = vmatpush.msra.mxu0 %v117
    %564 = vmatpush.msra.mxu0 %v113
    %565 = vmatpush.msra.mxu0 %v109
    %566 = vmatpush.msra.mxu0 %v105
    %567 = vmatpush.msra.mxu0 %v101
    %568 = vmatpush.msra.mxu0 %v97
    %569 = vmatpush.msra.mxu0 %v93
    %570 = vmatpush.msra.mxu0 %v89
    %571 = vmatmul.f32.gmra.mxu0 %v513
    %v572 = vpop.f32.mrf.mxu0
    %v573 = vadd.f32 0.0, %v572
    %574 = vdwg.mxu0
    %575 = vmatpush.msra.mxu0 0.0
    %576 = vmatpush.msra.mxu0 0.0
    %577 = vmatpush.msra.mxu0 0.0
    %578 = vmatpush.msra.mxu0 0.0
    %579 = vmatpush.msra.mxu0 0.0
    %580 = vmatpush.msra.mxu0 0.0
    %581 = vmatpush.msra.mxu0 0.0
    %582 = vmatpush.msra.mxu0 0.0
    %583 = vmatpush.msra.mxu0 %v118
    %584 = vmatpush.msra.mxu0 %v114
    %585 = vmatpush.msra.mxu0 %v110
    %586 = vmatpush.msra.mxu0 %v106
    %587 = vmatpush.msra.mxu0 %v102
    %588 = vmatpush.msra.mxu0 %v98
    %589 = vmatpush.msra.mxu0 %v94
    %590 = vmatpush.msra.mxu0 %v90
    %591 = vmatmul.f32.gmra.mxu0 %v513
    %v592 = vpop.f32.mrf.mxu0
    %v593 = vadd.f32 0.0, %v592
    %594 = vdwg.mxu0
    %v599 = vrot.slane %v553, 7
    %v600 = vrot.slane %v573, 6
    %v601 = vrot.slane %v593, 5
    %v602 = vsel %vm266, %v533, %v599
    %v603 = vsel %vm268, %v600, %v601
    %v604 = vsel %vm270, %v602, %v603
    %v606 = vadd.f32 %v145, %v604
    %v607 = vxor.u32 %v606, 2147483648
    %v608 = vmul.f32 %v607, 1.442695
    %v609 = vpow.pop %v608
    %v610 = vadd.f32 %v609, 1.0
    %v611 = vrcp.pop %v610
    %v612 = vmul.f32 %v610, %v611
    %v613 = vsub.f32 1.0, %v612
    %v614 = vmul.f32 %v611, %v613
    %v615 = vadd.f32 %v611, %v614
    %vm616 = vweird.f32 %v610
    %vm617 = vweird.f32 %v611
    %vm618 = vmor %vm616, %vm617
    %v619 = vsel %vm618, %v611, %v615
    %v620 = vand.u32 2147483647, %v610
    %vm621 = vcmp.eq.f32.partialorder %v620, 8.507059e+37
    %v622 = vand.u32 %v610, 2147483648
    %v623 = vor.u32 1.1754944e-38, %v622
    %v624 = vsel %vm621, %v623, %v619
    %v625 = vmul.f32 1.0, %v624
    %v627 = vrot.slane %v606, 1
    %v629 = vxor.u32 %v627, 2147483648
    %v630 = vmul.f32 %v629, 1.442695
    %v631 = vpow.pop %v630
    %v632 = vadd.f32 %v631, 1.0
    %v633 = vrcp.pop %v632
    %v634 = vmul.f32 %v632, %v633
    %v635 = vsub.f32 1.0, %v634
    %v636 = vmul.f32 %v633, %v635
    %v637 = vadd.f32 %v633, %v636
    %vm638 = vweird.f32 %v632
    %vm639 = vweird.f32 %v633
    %vm640 = vmor %vm638, %vm639
    %v641 = vsel %vm640, %v633, %v637
    %v642 = vand.u32 2147483647, %v632
    %vm643 = vcmp.eq.f32.partialorder %v642, 8.507059e+37
    %v644 = vand.u32 %v632, 2147483648
    %v645 = vor.u32 1.1754944e-38, %v644
    %v646 = vsel %vm643, %v645, %v641
    %v647 = vmul.f32 1.0, %v646
    %v648 = vrot.slane %v606, 2
    %v650 = vxor.u32 %v648, 2147483648
    %v651 = vmul.f32 %v650, 1.442695
    %v652 = vpow.pop %v651
    %v653 = vadd.f32 %v652, 1.0
    %v654 = vrcp.pop %v653
    %v655 = vmul.f32 %v653, %v654
    %v656 = vsub.f32 1.0, %v655
    %v657 = vmul.f32 %v654, %v656
    %v658 = vadd.f32 %v654, %v657
    %vm659 = vweird.f32 %v653
    %vm660 = vweird.f32 %v654
    %vm661 = vmor %vm659, %vm660
    %v662 = vsel %vm661, %v654, %v658
    %v663 = vand.u32 2147483647, %v653
    %vm664 = vcmp.eq.f32.partialorder %v663, 8.507059e+37
    %v665 = vand.u32 %v653, 2147483648
    %v666 = vor.u32 1.1754944e-38, %v665
    %v667 = vsel %vm664, %v666, %v662
    %v668 = vmul.f32 1.0, %v667
    %v669 = vrot.slane %v606, 3
    %v671 = vtanh.pop %v669
    %v672 = vmul.f32 %v647, %v508
    %v673 = vmul.f32 %v625, %v671
    %v674 = vadd.f32 %v672, %v673
    %v675 = vtanh.pop %v674
    %v676 = vmul.f32 %v668, %v675
    %677 = vst.msk [vmem:[#allocation2 + $0x2] sm:$0x1] %vm344, %v676
    %v679 = vsel %vm175, %v676, 0
    %681 = vmatpush.msra.mxu0 0.0
    %682 = vmatpush.msra.mxu0 0.0
    %683 = vmatpush.msra.mxu0 0.0
    %684 = vmatpush.msra.mxu0 0.0
    %685 = vmatpush.msra.mxu0 0.0
    %686 = vmatpush.msra.mxu0 0.0
    %687 = vmatpush.msra.mxu0 0.0
    %688 = vmatpush.msra.mxu0 0.0
    %689 = vmatpush.msra.mxu0 %v115
    %690 = vmatpush.msra.mxu0 %v111
    %691 = vmatpush.msra.mxu0 %v107
    %692 = vmatpush.msra.mxu0 %v103
    %693 = vmatpush.msra.mxu0 %v99
    %694 = vmatpush.msra.mxu0 %v95
    %695 = vmatpush.msra.mxu0 %v91
    %696 = vmatpush.msra.mxu0 %v87
    %697 = vmatmul.f32.gmra.mxu0 %v679
    %v698 = vpop.f32.mrf.mxu0
    %v699 = vadd.f32 0.0, %v698
    %700 = vdwg.mxu0
    %701 = vmatpush.msra.mxu0 0.0
    %702 = vmatpush.msra.mxu0 0.0
    %703 = vmatpush.msra.mxu0 0.0
    %704 = vmatpush.msra.mxu0 0.0
    %705 = vmatpush.msra.mxu0 0.0
    %706 = vmatpush.msra.mxu0 0.0
    %707 = vmatpush.msra.mxu0 0.0
    %708 = vmatpush.msra.mxu0 0.0
    %709 = vmatpush.msra.mxu0 %v116
    %710 = vmatpush.msra.mxu0 %v112
    %711 = vmatpush.msra.mxu0 %v108
    %712 = vmatpush.msra.mxu0 %v104
    %713 = vmatpush.msra.mxu0 %v100
    %714 = vmatpush.msra.mxu0 %v96
    %715 = vmatpush.msra.mxu0 %v92
    %716 = vmatpush.msra.mxu0 %v88
    %717 = vmatmul.f32.gmra.mxu0 %v679
    %v718 = vpop.f32.mrf.mxu0
    %v719 = vadd.f32 0.0, %v718
    %720 = vdwg.mxu0
    %721 = vmatpush.msra.mxu0 0.0
    %722 = vmatpush.msra.mxu0 0.0
    %723 = vmatpush.msra.mxu0 0.0
    %724 = vmatpush.msra.mxu0 0.0
    %725 = vmatpush.msra.mxu0 0.0
    %726 = vmatpush.msra.mxu0 0.0
    %727 = vmatpush.msra.mxu0 0.0
    %728 = vmatpush.msra.mxu0 0.0
    %729 = vmatpush.msra.mxu0 %v117
    %730 = vmatpush.msra.mxu0 %v113
    %731 = vmatpush.msra.mxu0 %v109
    %732 = vmatpush.msra.mxu0 %v105
    %733 = vmatpush.msra.mxu0 %v101
    %734 = vmatpush.msra.mxu0 %v97
    %735 = vmatpush.msra.mxu0 %v93
    %736 = vmatpush.msra.mxu0 %v89
    %737 = vmatmul.f32.gmra.mxu0 %v679
    %v738 = vpop.f32.mrf.mxu0
    %v739 = vadd.f32 0.0, %v738
    %740 = vdwg.mxu0
    %741 = vmatpush.msra.mxu0 0.0
    %742 = vmatpush.msra.mxu0 0.0
    %743 = vmatpush.msra.mxu0 0.0
    %744 = vmatpush.msra.mxu0 0.0
    %745 = vmatpush.msra.mxu0 0.0
    %746 = vmatpush.msra.mxu0 0.0
    %747 = vmatpush.msra.mxu0 0.0
    %748 = vmatpush.msra.mxu0 0.0
    %749 = vmatpush.msra.mxu0 %v118
    %750 = vmatpush.msra.mxu0 %v114
    %751 = vmatpush.msra.mxu0 %v110
    %752 = vmatpush.msra.mxu0 %v106
    %753 = vmatpush.msra.mxu0 %v102
    %754 = vmatpush.msra.mxu0 %v98
    %755 = vmatpush.msra.mxu0 %v94
    %756 = vmatpush.msra.mxu0 %v90
    %757 = vmatmul.f32.gmra.mxu0 %v679
    %v758 = vpop.f32.mrf.mxu0
    %v759 = vadd.f32 0.0, %v758
    %760 = vdwg.mxu0
    %v765 = vrot.slane %v719, 7
    %v766 = vrot.slane %v739, 6
    %v767 = vrot.slane %v759, 5
    %v768 = vsel %vm266, %v699, %v765
    %v769 = vsel %vm268, %v766, %v767
    %v770 = vsel %vm270, %v768, %v769
    %v772 = vadd.f32 %v154, %v770
    %v773 = vxor.u32 %v772, 2147483648
    %v774 = vmul.f32 %v773, 1.442695
    %v775 = vpow.pop %v774
    %v776 = vadd.f32 %v775, 1.0
    %v777 = vrcp.pop %v776
    %v778 = vmul.f32 %v776, %v777
    %v779 = vsub.f32 1.0, %v778
    %v780 = vmul.f32 %v777, %v779
    %v781 = vadd.f32 %v777, %v780
    %vm782 = vweird.f32 %v776
    %vm783 = vweird.f32 %v777
    %vm784 = vmor %vm782, %vm783
    %v785 = vsel %vm784, %v777, %v781
    %v786 = vand.u32 2147483647, %v776
    %vm787 = vcmp.eq.f32.partialorder %v786, 8.507059e+37
    %v788 = vand.u32 %v776, 2147483648
    %v789 = vor.u32 1.1754944e-38, %v788
    %v790 = vsel %vm787, %v789, %v785
    %v791 = vmul.f32 1.0, %v790
    %v793 = vrot.slane %v772, 1
    %v795 = vxor.u32 %v793, 2147483648
    %v796 = vmul.f32 %v795, 1.442695
    %v797 = vpow.pop %v796
    %v798 = vadd.f32 %v797, 1.0
    %v799 = vrcp.pop %v798
    %v800 = vmul.f32 %v798, %v799
    %v801 = vsub.f32 1.0, %v800
    %v802 = vmul.f32 %v799, %v801
    %v803 = vadd.f32 %v799, %v802
    %vm804 = vweird.f32 %v798
    %vm805 = vweird.f32 %v799
    %vm806 = vmor %vm804, %vm805
    %v807 = vsel %vm806, %v799, %v803
    %v808 = vand.u32 2147483647, %v798
    %vm809 = vcmp.eq.f32.partialorder %v808, 8.507059e+37
    %v810 = vand.u32 %v798, 2147483648
    %v811 = vor.u32 1.1754944e-38, %v810
    %v812 = vsel %vm809, %v811, %v807
    %v813 = vmul.f32 1.0, %v812
    %v814 = vrot.slane %v772, 2
    %v816 = vxor.u32 %v814, 2147483648
    %v817 = vmul.f32 %v816, 1.442695
    %v818 = vpow.pop %v817
    %v819 = vadd.f32 %v818, 1.0
    %v820 = vrcp.pop %v819
    %v821 = vmul.f32 %v819, %v820
    %v822 = vsub.f32 1.0, %v821
    %v823 = vmul.f32 %v820, %v822
    %v824 = vadd.f32 %v820, %v823
    %vm825 = vweird.f32 %v819
    %vm826 = vweird.f32 %v820
    %vm827 = vmor %vm825, %vm826
    %v828 = vsel %vm827, %v820, %v824
    %v829 = vand.u32 2147483647, %v819
    %vm830 = vcmp.eq.f32.partialorder %v829, 8.507059e+37
    %v831 = vand.u32 %v819, 2147483648
    %v832 = vor.u32 1.1754944e-38, %v831
    %v833 = vsel %vm830, %v832, %v828
    %v834 = vmul.f32 1.0, %v833
    %v835 = vrot.slane %v772, 3
    %v837 = vtanh.pop %v835
    %v838 = vmul.f32 %v813, %v674
    %v839 = vmul.f32 %v791, %v837
    %v840 = vadd.f32 %v838, %v839
    %v841 = vtanh.pop %v840
    %v842 = vmul.f32 %v834, %v841
    %843 = vst.msk [vmem:[#allocation2 + $0x3] sm:$0x1] %vm344, %v842
    %v845 = vsel %vm175, %v842, 0
    %847 = vmatpush.msra.mxu0 0.0
    %848 = vmatpush.msra.mxu0 0.0
    %849 = vmatpush.msra.mxu0 0.0
    %850 = vmatpush.msra.mxu0 0.0
    %851 = vmatpush.msra.mxu0 0.0
    %852 = vmatpush.msra.mxu0 0.0
    %853 = vmatpush.msra.mxu0 0.0
    %854 = vmatpush.msra.mxu0 0.0
    %855 = vmatpush.msra.mxu0 %v115
    %856 = vmatpush.msra.mxu0 %v111
    %857 = vmatpush.msra.mxu0 %v107
    %858 = vmatpush.msra.mxu0 %v103
    %859 = vmatpush.msra.mxu0 %v99
    %860 = vmatpush.msra.mxu0 %v95
    %861 = vmatpush.msra.mxu0 %v91
    %862 = vmatpush.msra.mxu0 %v87
    %863 = vmatmul.f32.gmra.mxu0 %v845
    %v864 = vpop.f32.mrf.mxu0
    %v865 = vadd.f32 0.0, %v864
    %866 = vdwg.mxu0
    %867 = vmatpush.msra.mxu0 0.0
    %868 = vmatpush.msra.mxu0 0.0
    %869 = vmatpush.msra.mxu0 0.0
    %870 = vmatpush.msra.mxu0 0.0
    %871 = vmatpush.msra.mxu0 0.0
    %872 = vmatpush.msra.mxu0 0.0
    %873 = vmatpush.msra.mxu0 0.0
    %874 = vmatpush.msra.mxu0 0.0
    %875 = vmatpush.msra.mxu0 %v116
    %876 = vmatpush.msra.mxu0 %v112
    %877 = vmatpush.msra.mxu0 %v108
    %878 = vmatpush.msra.mxu0 %v104
    %879 = vmatpush.msra.mxu0 %v100
    %880 = vmatpush.msra.mxu0 %v96
    %881 = vmatpush.msra.mxu0 %v92
    %882 = vmatpush.msra.mxu0 %v88
    %883 = vmatmul.f32.gmra.mxu0 %v845
    %v884 = vpop.f32.mrf.mxu0
    %v885 = vadd.f32 0.0, %v884
    %886 = vdwg.mxu0
    %887 = vmatpush.msra.mxu0 0.0
    %888 = vmatpush.msra.mxu0 0.0
    %889 = vmatpush.msra.mxu0 0.0
    %890 = vmatpush.msra.mxu0 0.0
    %891 = vmatpush.msra.mxu0 0.0
    %892 = vmatpush.msra.mxu0 0.0
    %893 = vmatpush.msra.mxu0 0.0
    %894 = vmatpush.msra.mxu0 0.0
    %895 = vmatpush.msra.mxu0 %v117
    %896 = vmatpush.msra.mxu0 %v113
    %897 = vmatpush.msra.mxu0 %v109
    %898 = vmatpush.msra.mxu0 %v105
    %899 = vmatpush.msra.mxu0 %v101
    %900 = vmatpush.msra.mxu0 %v97
    %901 = vmatpush.msra.mxu0 %v93
    %902 = vmatpush.msra.mxu0 %v89
    %903 = vmatmul.f32.gmra.mxu0 %v845
    %v904 = vpop.f32.mrf.mxu0
    %v905 = vadd.f32 0.0, %v904
    %906 = vdwg.mxu0
    %907 = vmatpush.msra.mxu0 0.0
    %908 = vmatpush.msra.mxu0 0.0
    %909 = vmatpush.msra.mxu0 0.0
    %910 = vmatpush.msra.mxu0 0.0
    %911 = vmatpush.msra.mxu0 0.0
    %912 = vmatpush.msra.mxu0 0.0
    %913 = vmatpush.msra.mxu0 0.0
    %914 = vmatpush.msra.mxu0 0.0
    %915 = vmatpush.msra.mxu0 %v118
    %916 = vmatpush.msra.mxu0 %v114
    %917 = vmatpush.msra.mxu0 %v110
    %918 = vmatpush.msra.mxu0 %v106
    %919 = vmatpush.msra.mxu0 %v102
    %920 = vmatpush.msra.mxu0 %v98
    %921 = vmatpush.msra.mxu0 %v94
    %922 = vmatpush.msra.mxu0 %v90
    %923 = vmatmul.f32.gmra.mxu0 %v845
    %v924 = vpop.f32.mrf.mxu0
    %v925 = vadd.f32 0.0, %v924
    %926 = vdwg.mxu0
    %v931 = vrot.slane %v885, 7
    %v932 = vrot.slane %v905, 6
    %v933 = vrot.slane %v925, 5
    %v934 = vsel %vm266, %v865, %v931
    %v935 = vsel %vm268, %v932, %v933
    %v936 = vsel %vm270, %v934, %v935
    %v938 = vadd.f32 %v159, %v936
    %v939 = vxor.u32 %v938, 2147483648
    %v940 = vmul.f32 %v939, 1.442695
    %v941 = vpow.pop %v940
    %v942 = vadd.f32 %v941, 1.0
    %v943 = vrcp.pop %v942
    %v944 = vmul.f32 %v942, %v943
    %v945 = vsub.f32 1.0, %v944
    %v946 = vmul.f32 %v943, %v945
    %v947 = vadd.f32 %v943, %v946
    %vm948 = vweird.f32 %v942
    %vm949 = vweird.f32 %v943
    %vm950 = vmor %vm948, %vm949
    %v951 = vsel %vm950, %v943, %v947
    %v952 = vand.u32 2147483647, %v942
    %vm953 = vcmp.eq.f32.partialorder %v952, 8.507059e+37
    %v954 = vand.u32 %v942, 2147483648
    %v955 = vor.u32 1.1754944e-38, %v954
    %v956 = vsel %vm953, %v955, %v951
    %v957 = vmul.f32 1.0, %v956
    %v959 = vrot.slane %v938, 1
    %v961 = vxor.u32 %v959, 2147483648
    %v962 = vmul.f32 %v961, 1.442695
    %v963 = vpow.pop %v962
    %v964 = vadd.f32 %v963, 1.0
    %v965 = vrcp.pop %v964
    %v966 = vmul.f32 %v964, %v965
    %v967 = vsub.f32 1.0, %v966
    %v968 = vmul.f32 %v965, %v967
    %v969 = vadd.f32 %v965, %v968
    %vm970 = vweird.f32 %v964
    %vm971 = vweird.f32 %v965
    %vm972 = vmor %vm970, %vm971
    %v973 = vsel %vm972, %v965, %v969
    %v974 = vand.u32 2147483647, %v964
    %vm975 = vcmp.eq.f32.partialorder %v974, 8.507059e+37
    %v976 = vand.u32 %v964, 2147483648
    %v977 = vor.u32 1.1754944e-38, %v976
    %v978 = vsel %vm975, %v977, %v973
    %v979 = vmul.f32 1.0, %v978
    %v980 = vrot.slane %v938, 2
    %v982 = vxor.u32 %v980, 2147483648
    %v983 = vmul.f32 %v982, 1.442695
    %v984 = vpow.pop %v983
    %v985 = vadd.f32 %v984, 1.0
    %v986 = vrcp.pop %v985
    %v987 = vmul.f32 %v985, %v986
    %v988 = vsub.f32 1.0, %v987
    %v989 = vmul.f32 %v986, %v988
    %v990 = vadd.f32 %v986, %v989
    %vm991 = vweird.f32 %v985
    %vm992 = vweird.f32 %v986
    %vm993 = vmor %vm991, %vm992
    %v994 = vsel %vm993, %v986, %v990
    %v995 = vand.u32 2147483647, %v985
    %vm996 = vcmp.eq.f32.partialorder %v995, 8.507059e+37
    %v997 = vand.u32 %v985, 2147483648
    %v998 = vor.u32 1.1754944e-38, %v997
    %v999 = vsel %vm996, %v998, %v994
    %v1000 = vmul.f32 1.0, %v999
    %v1001 = vrot.slane %v938, 3
    %v1003 = vtanh.pop %v1001
    %v1004 = vmul.f32 %v979, %v840
    %v1005 = vmul.f32 %v957, %v1003
    %v1006 = vadd.f32 %v1004, %v1005
    %v1007 = vtanh.pop %v1006
    %v1008 = vmul.f32 %v1000, %v1007
    %1009 = vst.msk [vmem:[#allocation2 + $0x4] sm:$0x1] %vm344, %v1008
    %v1011 = vsel %vm175, %v1008, 0
    %1013 = vmatpush.msra.mxu0 0.0
    %1014 = vmatpush.msra.mxu0 0.0
    %1015 = vmatpush.msra.mxu0 0.0
    %1016 = vmatpush.msra.mxu0 0.0
    %1017 = vmatpush.msra.mxu0 0.0
    %1018 = vmatpush.msra.mxu0 0.0
    %1019 = vmatpush.msra.mxu0 0.0
    %1020 = vmatpush.msra.mxu0 0.0
    %1021 = vmatpush.msra.mxu0 %v115
    %1022 = vmatpush.msra.mxu0 %v111
    %1023 = vmatpush.msra.mxu0 %v107
    %1024 = vmatpush.msra.mxu0 %v103
    %1025 = vmatpush.msra.mxu0 %v99
    %1026 = vmatpush.msra.mxu0 %v95
    %1027 = vmatpush.msra.mxu0 %v91
    %1028 = vmatpush.msra.mxu0 %v87
    %1029 = vmatmul.f32.gmra.mxu0 %v1011
    %v1030 = vpop.f32.mrf.mxu0
    %v1031 = vadd.f32 0.0, %v1030
    %1032 = vdwg.mxu0
    %1033 = vmatpush.msra.mxu0 0.0
    %1034 = vmatpush.msra.mxu0 0.0
    %1035 = vmatpush.msra.mxu0 0.0
    %1036 = vmatpush.msra.mxu0 0.0
    %1037 = vmatpush.msra.mxu0 0.0
    %1038 = vmatpush.msra.mxu0 0.0
    %1039 = vmatpush.msra.mxu0 0.0
    %1040 = vmatpush.msra.mxu0 0.0
    %1041 = vmatpush.msra.mxu0 %v116
    %1042 = vmatpush.msra.mxu0 %v112
    %1043 = vmatpush.msra.mxu0 %v108
    %1044 = vmatpush.msra.mxu0 %v104
    %1045 = vmatpush.msra.mxu0 %v100
    %1046 = vmatpush.msra.mxu0 %v96
    %1047 = vmatpush.msra.mxu0 %v92
    %1048 = vmatpush.msra.mxu0 %v88
    %1049 = vmatmul.f32.gmra.mxu0 %v1011
    %v1050 = vpop.f32.mrf.mxu0
    %v1051 = vadd.f32 0.0, %v1050
    %1052 = vdwg.mxu0
    %1053 = vmatpush.msra.mxu0 0.0
    %1054 = vmatpush.msra.mxu0 0.0
    %1055 = vmatpush.msra.mxu0 0.0
    %1056 = vmatpush.msra.mxu0 0.0
    %1057 = vmatpush.msra.mxu0 0.0
    %1058 = vmatpush.msra.mxu0 0.0
    %1059 = vmatpush.msra.mxu0 0.0
    %1060 = vmatpush.msra.mxu0 0.0
    %1061 = vmatpush.msra.mxu0 %v117
    %1062 = vmatpush.msra.mxu0 %v113
    %1063 = vmatpush.msra.mxu0 %v109
    %1064 = vmatpush.msra.mxu0 %v105
    %1065 = vmatpush.msra.mxu0 %v101
    %1066 = vmatpush.msra.mxu0 %v97
    %1067 = vmatpush.msra.mxu0 %v93
    %1068 = vmatpush.msra.mxu0 %v89
    %1069 = vmatmul.f32.gmra.mxu0 %v1011
    %v1070 = vpop.f32.mrf.mxu0
    %v1071 = vadd.f32 0.0, %v1070
    %1072 = vdwg.mxu0
    %1073 = vmatpush.msra.mxu0 0.0
    %1074 = vmatpush.msra.mxu0 0.0
    %1075 = vmatpush.msra.mxu0 0.0
    %1076 = vmatpush.msra.mxu0 0.0
    %1077 = vmatpush.msra.mxu0 0.0
    %1078 = vmatpush.msra.mxu0 0.0
    %1079 = vmatpush.msra.mxu0 0.0
    %1080 = vmatpush.msra.mxu0 0.0
    %1081 = vmatpush.msra.mxu0 %v118
    %1082 = vmatpush.msra.mxu0 %v114
    %1083 = vmatpush.msra.mxu0 %v110
    %1084 = vmatpush.msra.mxu0 %v106
    %1085 = vmatpush.msra.mxu0 %v102
    %1086 = vmatpush.msra.mxu0 %v98
    %1087 = vmatpush.msra.mxu0 %v94
    %1088 = vmatpush.msra.mxu0 %v90
    %1089 = vmatmul.f32.gmra.mxu0 %v1011
    %v1090 = vpop.f32.mrf.mxu0
    %v1091 = vadd.f32 0.0, %v1090
    %1092 = vdwg.mxu0
    %v1097 = vrot.slane %v1051, 7
    %v1098 = vrot.slane %v1071, 6
    %v1099 = vrot.slane %v1091, 5
    %v1100 = vsel %vm266, %v1031, %v1097
    %v1101 = vsel %vm268, %v1098, %v1099
    %v1102 = vsel %vm270, %v1100, %v1101
    %v1104 = vadd.f32 %v164, %v1102
    %v1105 = vxor.u32 %v1104, 2147483648
    %v1106 = vmul.f32 %v1105, 1.442695
    %v1107 = vpow.pop %v1106
    %v1108 = vadd.f32 %v1107, 1.0
    %v1109 = vrcp.pop %v1108
    %v1110 = vmul.f32 %v1108, %v1109
    %v1111 = vsub.f32 1.0, %v1110
    %v1112 = vmul.f32 %v1109, %v1111
    %v1113 = vadd.f32 %v1109, %v1112
    %vm1114 = vweird.f32 %v1108
    %vm1115 = vweird.f32 %v1109
    %vm1116 = vmor %vm1114, %vm1115
    %v1117 = vsel %vm1116, %v1109, %v1113
    %v1118 = vand.u32 2147483647, %v1108
    %vm1119 = vcmp.eq.f32.partialorder %v1118, 8.507059e+37
    %v1120 = vand.u32 %v1108, 2147483648
    %v1121 = vor.u32 1.1754944e-38, %v1120
    %v1122 = vsel %vm1119, %v1121, %v1117
    %v1123 = vmul.f32 1.0, %v1122
    %v1125 = vrot.slane %v1104, 1
    %v1127 = vxor.u32 %v1125, 2147483648
    %v1128 = vmul.f32 %v1127, 1.442695
    %v1129 = vpow.pop %v1128
    %v1130 = vadd.f32 %v1129, 1.0
    %v1131 = vrcp.pop %v1130
    %v1132 = vmul.f32 %v1130, %v1131
    %v1133 = vsub.f32 1.0, %v1132
    %v1134 = vmul.f32 %v1131, %v1133
    %v1135 = vadd.f32 %v1131, %v1134
    %vm1136 = vweird.f32 %v1130
    %vm1137 = vweird.f32 %v1131
    %vm1138 = vmor %vm1136, %vm1137
    %v1139 = vsel %vm1138, %v1131, %v1135
    %v1140 = vand.u32 2147483647, %v1130
    %vm1141 = vcmp.eq.f32.partialorder %v1140, 8.507059e+37
    %v1142 = vand.u32 %v1130, 2147483648
    %v1143 = vor.u32 1.1754944e-38, %v1142
    %v1144 = vsel %vm1141, %v1143, %v1139
    %v1145 = vmul.f32 1.0, %v1144
    %v1146 = vrot.slane %v1104, 2
    %v1148 = vxor.u32 %v1146, 2147483648
    %v1149 = vmul.f32 %v1148, 1.442695
    %v1150 = vpow.pop %v1149
    %v1151 = vadd.f32 %v1150, 1.0
    %v1152 = vrcp.pop %v1151
    %v1153 = vmul.f32 %v1151, %v1152
    %v1154 = vsub.f32 1.0, %v1153
    %v1155 = vmul.f32 %v1152, %v1154
    %v1156 = vadd.f32 %v1152, %v1155
    %vm1157 = vweird.f32 %v1151
    %vm1158 = vweird.f32 %v1152
    %vm1159 = vmor %vm1157, %vm1158
    %v1160 = vsel %vm1159, %v1152, %v1156
    %v1161 = vand.u32 2147483647, %v1151
    %vm1162 = vcmp.eq.f32.partialorder %v1161, 8.507059e+37
    %v1163 = vand.u32 %v1151, 2147483648
    %v1164 = vor.u32 1.1754944e-38, %v1163
    %v1165 = vsel %vm1162, %v1164, %v1160
    %v1166 = vmul.f32 1.0, %v1165
    %v1167 = vrot.slane %v1104, 3
    %v1169 = vtanh.pop %v1167
    %v1170 = vmul.f32 %v1145, %v1006
    %v1171 = vmul.f32 %v1123, %v1169
    %v1172 = vadd.f32 %v1170, %v1171
    %v1173 = vtanh.pop %v1172
    %v1174 = vmul.f32 %v1166, %v1173
    %1175 = vst.msk [vmem:[#allocation2 + $0x5] sm:$0x1] %vm344, %v1174
    %v1177 = vsel %vm175, %v1174, 0
    %1179 = vmatpush.msra.mxu0 0.0
    %1180 = vmatpush.msra.mxu0 0.0
    %1181 = vmatpush.msra.mxu0 0.0
    %1182 = vmatpush.msra.mxu0 0.0
    %1183 = vmatpush.msra.mxu0 0.0
    %1184 = vmatpush.msra.mxu0 0.0
    %1185 = vmatpush.msra.mxu0 0.0
    %1186 = vmatpush.msra.mxu0 0.0
    %1187 = vmatpush.msra.mxu0 %v115
    %1188 = vmatpush.msra.mxu0 %v111
    %1189 = vmatpush.msra.mxu0 %v107
    %1190 = vmatpush.msra.mxu0 %v103
    %1191 = vmatpush.msra.mxu0 %v99
    %1192 = vmatpush.msra.mxu0 %v95
    %1193 = vmatpush.msra.mxu0 %v91
    %1194 = vmatpush.msra.mxu0 %v87
    %1195 = vmatmul.f32.gmra.mxu0 %v1177
    %v1196 = vpop.f32.mrf.mxu0
    %v1197 = vadd.f32 0.0, %v1196
    %1198 = vdwg.mxu0
    %1199 = vmatpush.msra.mxu0 0.0
    %1200 = vmatpush.msra.mxu0 0.0
    %1201 = vmatpush.msra.mxu0 0.0
    %1202 = vmatpush.msra.mxu0 0.0
    %1203 = vmatpush.msra.mxu0 0.0
    %1204 = vmatpush.msra.mxu0 0.0
    %1205 = vmatpush.msra.mxu0 0.0
    %1206 = vmatpush.msra.mxu0 0.0
    %1207 = vmatpush.msra.mxu0 %v116
    %1208 = vmatpush.msra.mxu0 %v112
    %1209 = vmatpush.msra.mxu0 %v108
    %1210 = vmatpush.msra.mxu0 %v104
    %1211 = vmatpush.msra.mxu0 %v100
    %1212 = vmatpush.msra.mxu0 %v96
    %1213 = vmatpush.msra.mxu0 %v92
    %1214 = vmatpush.msra.mxu0 %v88
    %1215 = vmatmul.f32.gmra.mxu0 %v1177
    %v1216 = vpop.f32.mrf.mxu0
    %v1217 = vadd.f32 0.0, %v1216
    %1218 = vdwg.mxu0
    %1219 = vmatpush.msra.mxu0 0.0
    %1220 = vmatpush.msra.mxu0 0.0
    %1221 = vmatpush.msra.mxu0 0.0
    %1222 = vmatpush.msra.mxu0 0.0
    %1223 = vmatpush.msra.mxu0 0.0
    %1224 = vmatpush.msra.mxu0 0.0
    %1225 = vmatpush.msra.mxu0 0.0
    %1226 = vmatpush.msra.mxu0 0.0
    %1227 = vmatpush.msra.mxu0 %v117
    %1228 = vmatpush.msra.mxu0 %v113
    %1229 = vmatpush.msra.mxu0 %v109
    %1230 = vmatpush.msra.mxu0 %v105
    %1231 = vmatpush.msra.mxu0 %v101
    %1232 = vmatpush.msra.mxu0 %v97
    %1233 = vmatpush.msra.mxu0 %v93
    %1234 = vmatpush.msra.mxu0 %v89
    %1235 = vmatmul.f32.gmra.mxu0 %v1177
    %v1236 = vpop.f32.mrf.mxu0
    %v1237 = vadd.f32 0.0, %v1236
    %1238 = vdwg.mxu0
    %1239 = vmatpush.msra.mxu0 0.0
    %1240 = vmatpush.msra.mxu0 0.0
    %1241 = vmatpush.msra.mxu0 0.0
    %1242 = vmatpush.msra.mxu0 0.0
    %1243 = vmatpush.msra.mxu0 0.0
    %1244 = vmatpush.msra.mxu0 0.0
    %1245 = vmatpush.msra.mxu0 0.0
    %1246 = vmatpush.msra.mxu0 0.0
    %1247 = vmatpush.msra.mxu0 %v118
    %1248 = vmatpush.msra.mxu0 %v114
    %1249 = vmatpush.msra.mxu0 %v110
    %1250 = vmatpush.msra.mxu0 %v106
    %1251 = vmatpush.msra.mxu0 %v102
    %1252 = vmatpush.msra.mxu0 %v98
    %1253 = vmatpush.msra.mxu0 %v94
    %1254 = vmatpush.msra.mxu0 %v90
    %1255 = vmatmul.f32.gmra.mxu0 %v1177
    %v1256 = vpop.f32.mrf.mxu0
    %v1257 = vadd.f32 0.0, %v1256
    %1258 = vdwg.mxu0
    %v1263 = vrot.slane %v1217, 7
    %v1264 = vrot.slane %v1237, 6
    %v1265 = vrot.slane %v1257, 5
    %v1266 = vsel %vm266, %v1197, %v1263
    %v1267 = vsel %vm268, %v1264, %v1265
    %v1268 = vsel %vm270, %v1266, %v1267
    %v1270 = vadd.f32 %v169, %v1268
    %v1271 = vxor.u32 %v1270, 2147483648
    %v1272 = vmul.f32 %v1271, 1.442695
    %v1273 = vpow.pop %v1272
    %v1274 = vadd.f32 %v1273, 1.0
    %v1275 = vrcp.pop %v1274
    %v1276 = vmul.f32 %v1274, %v1275
    %v1277 = vsub.f32 1.0, %v1276
    %v1278 = vmul.f32 %v1275, %v1277
    %v1279 = vadd.f32 %v1275, %v1278
    %vm1280 = vweird.f32 %v1274
    %vm1281 = vweird.f32 %v1275
    %vm1282 = vmor %vm1280, %vm1281
    %v1283 = vsel %vm1282, %v1275, %v1279
    %v1284 = vand.u32 2147483647, %v1274
    %vm1285 = vcmp.eq.f32.partialorder %v1284, 8.507059e+37
    %v1286 = vand.u32 %v1274, 2147483648
    %v1287 = vor.u32 1.1754944e-38, %v1286
    %v1288 = vsel %vm1285, %v1287, %v1283
    %v1289 = vmul.f32 1.0, %v1288
    %v1291 = vrot.slane %v1270, 1
    %v1293 = vxor.u32 %v1291, 2147483648
    %v1294 = vmul.f32 %v1293, 1.442695
    %v1295 = vpow.pop %v1294
    %v1296 = vadd.f32 %v1295, 1.0
    %v1297 = vrcp.pop %v1296
    %v1298 = vmul.f32 %v1296, %v1297
    %v1299 = vsub.f32 1.0, %v1298
    %v1300 = vmul.f32 %v1297, %v1299
    %v1301 = vadd.f32 %v1297, %v1300
    %vm1302 = vweird.f32 %v1296
    %vm1303 = vweird.f32 %v1297
    %vm1304 = vmor %vm1302, %vm1303
    %v1305 = vsel %vm1304, %v1297, %v1301
    %v1306 = vand.u32 2147483647, %v1296
    %vm1307 = vcmp.eq.f32.partialorder %v1306, 8.507059e+37
    %v1308 = vand.u32 %v1296, 2147483648
    %v1309 = vor.u32 1.1754944e-38, %v1308
    %v1310 = vsel %vm1307, %v1309, %v1305
    %v1311 = vmul.f32 1.0, %v1310
    %v1312 = vrot.slane %v1270, 2
    %v1314 = vxor.u32 %v1312, 2147483648
    %v1315 = vmul.f32 %v1314, 1.442695
    %v1316 = vpow.pop %v1315
    %v1317 = vadd.f32 %v1316, 1.0
    %v1318 = vrcp.pop %v1317
    %v1319 = vmul.f32 %v1317, %v1318
    %v1320 = vsub.f32 1.0, %v1319
    %v1321 = vmul.f32 %v1318, %v1320
    %v1322 = vadd.f32 %v1318, %v1321
    %vm1323 = vweird.f32 %v1317
    %vm1324 = vweird.f32 %v1318
    %vm1325 = vmor %vm1323, %vm1324
    %v1326 = vsel %vm1325, %v1318, %v1322
    %v1327 = vand.u32 2147483647, %v1317
    %vm1328 = vcmp.eq.f32.partialorder %v1327, 8.507059e+37
    %v1329 = vand.u32 %v1317, 2147483648
    %v1330 = vor.u32 1.1754944e-38, %v1329
    %v1331 = vsel %vm1328, %v1330, %v1326
    %v1332 = vmul.f32 1.0, %v1331
    %v1333 = vrot.slane %v1270, 3
    %v1335 = vtanh.pop %v1333
    %v1336 = vmul.f32 %v1311, %v1172
    %v1337 = vmul.f32 %v1289, %v1335
    %v1338 = vadd.f32 %v1336, %v1337
    %v1339 = vtanh.pop %v1338
    %v1340 = vmul.f32 %v1332, %v1339
    %1341 = vst.msk [vmem:[#allocation2 + $0x6] sm:$0x1] %vm344, %v1340
    %v1343 = vsel %vm175, %v1340, 0
    %1345 = vmatpush.msra.mxu0 0.0
    %1346 = vmatpush.msra.mxu0 0.0
    %1347 = vmatpush.msra.mxu0 0.0
    %1348 = vmatpush.msra.mxu0 0.0
    %1349 = vmatpush.msra.mxu0 0.0
    %1350 = vmatpush.msra.mxu0 0.0
    %1351 = vmatpush.msra.mxu0 0.0
    %1352 = vmatpush.msra.mxu0 0.0
    %1353 = vmatpush.msra.mxu0 %v115
    %1354 = vmatpush.msra.mxu0 %v111
    %1355 = vmatpush.msra.mxu0 %v107
    %1356 = vmatpush.msra.mxu0 %v103
    %1357 = vmatpush.msra.mxu0 %v99
    %1358 = vmatpush.msra.mxu0 %v95
    %1359 = vmatpush.msra.mxu0 %v91
    %1360 = vmatpush.msra.mxu0 %v87
    %1361 = vmatmul.f32.gmra.mxu0 %v1343
    %v1362 = vpop.f32.mrf.mxu0
    %v1363 = vadd.f32 0.0, %v1362
    %1364 = vdwg.mxu0
    %1365 = vmatpush.msra.mxu0 0.0
    %1366 = vmatpush.msra.mxu0 0.0
    %1367 = vmatpush.msra.mxu0 0.0
    %1368 = vmatpush.msra.mxu0 0.0
    %1369 = vmatpush.msra.mxu0 0.0
    %1370 = vmatpush.msra.mxu0 0.0
    %1371 = vmatpush.msra.mxu0 0.0
    %1372 = vmatpush.msra.mxu0 0.0
    %1373 = vmatpush.msra.mxu0 %v116
    %1374 = vmatpush.msra.mxu0 %v112
    %1375 = vmatpush.msra.mxu0 %v108
    %1376 = vmatpush.msra.mxu0 %v104
    %1377 = vmatpush.msra.mxu0 %v100
    %1378 = vmatpush.msra.mxu0 %v96
    %1379 = vmatpush.msra.mxu0 %v92
    %1380 = vmatpush.msra.mxu0 %v88
    %1381 = vmatmul.f32.gmra.mxu0 %v1343
    %v1382 = vpop.f32.mrf.mxu0
    %v1383 = vadd.f32 0.0, %v1382
    %1384 = vdwg.mxu0
    %1385 = vmatpush.msra.mxu0 0.0
    %1386 = vmatpush.msra.mxu0 0.0
    %1387 = vmatpush.msra.mxu0 0.0
    %1388 = vmatpush.msra.mxu0 0.0
    %1389 = vmatpush.msra.mxu0 0.0
    %1390 = vmatpush.msra.mxu0 0.0
    %1391 = vmatpush.msra.mxu0 0.0
    %1392 = vmatpush.msra.mxu0 0.0
    %1393 = vmatpush.msra.mxu0 %v117
    %1394 = vmatpush.msra.mxu0 %v113
    %1395 = vmatpush.msra.mxu0 %v109
    %1396 = vmatpush.msra.mxu0 %v105
    %1397 = vmatpush.msra.mxu0 %v101
    %1398 = vmatpush.msra.mxu0 %v97
    %1399 = vmatpush.msra.mxu0 %v93
    %1400 = vmatpush.msra.mxu0 %v89
    %1401 = vmatmul.f32.gmra.mxu0 %v1343
    %v1402 = vpop.f32.mrf.mxu0
    %v1403 = vadd.f32 0.0, %v1402
    %1404 = vdwg.mxu0
    %1405 = vmatpush.msra.mxu0 0.0
    %1406 = vmatpush.msra.mxu0 0.0
    %1407 = vmatpush.msra.mxu0 0.0
    %1408 = vmatpush.msra.mxu0 0.0
    %1409 = vmatpush.msra.mxu0 0.0
    %1410 = vmatpush.msra.mxu0 0.0
    %1411 = vmatpush.msra.mxu0 0.0
    %1412 = vmatpush.msra.mxu0 0.0
    %1413 = vmatpush.msra.mxu0 %v118
    %1414 = vmatpush.msra.mxu0 %v114
    %1415 = vmatpush.msra.mxu0 %v110
    %1416 = vmatpush.msra.mxu0 %v106
    %1417 = vmatpush.msra.mxu0 %v102
    %1418 = vmatpush.msra.mxu0 %v98
    %1419 = vmatpush.msra.mxu0 %v94
    %1420 = vmatpush.msra.mxu0 %v90
    %1421 = vmatmul.f32.gmra.mxu0 %v1343
    %v1422 = vpop.f32.mrf.mxu0
    %v1423 = vadd.f32 0.0, %v1422
    %1424 = vdwg.mxu0
    %v1429 = vrot.slane %v1383, 7
    %v1430 = vrot.slane %v1403, 6
    %v1431 = vrot.slane %v1423, 5
    %v1432 = vsel %vm266, %v1363, %v1429
    %v1433 = vsel %vm268, %v1430, %v1431
    %v1434 = vsel %vm270, %v1432, %v1433
    %v1436 = vadd.f32 %v174, %v1434
    %v1437 = vxor.u32 %v1436, 2147483648
    %v1438 = vmul.f32 %v1437, 1.442695
    %v1439 = vpow.pop %v1438
    %v1440 = vadd.f32 %v1439, 1.0
    %v1441 = vrcp.pop %v1440
    %v1442 = vmul.f32 %v1440, %v1441
    %v1443 = vsub.f32 1.0, %v1442
    %v1444 = vmul.f32 %v1441, %v1443
    %v1445 = vadd.f32 %v1441, %v1444
    %vm1446 = vweird.f32 %v1440
    %vm1447 = vweird.f32 %v1441
    %vm1448 = vmor %vm1446, %vm1447
    %v1449 = vsel %vm1448, %v1441, %v1445
    %v1450 = vand.u32 2147483647, %v1440
    %vm1451 = vcmp.eq.f32.partialorder %v1450, 8.507059e+37
    %v1452 = vand.u32 %v1440, 2147483648
    %v1453 = vor.u32 1.1754944e-38, %v1452
    %v1454 = vsel %vm1451, %v1453, %v1449
    %v1455 = vmul.f32 1.0, %v1454
    %v1457 = vrot.slane %v1436, 1
    %v1459 = vxor.u32 %v1457, 2147483648
    %v1460 = vmul.f32 %v1459, 1.442695
    %v1461 = vpow.pop %v1460
    %v1462 = vadd.f32 %v1461, 1.0
    %v1463 = vrcp.pop %v1462
    %v1464 = vmul.f32 %v1462, %v1463
    %v1465 = vsub.f32 1.0, %v1464
    %v1466 = vmul.f32 %v1463, %v1465
    %v1467 = vadd.f32 %v1463, %v1466
    %vm1468 = vweird.f32 %v1462
    %vm1469 = vweird.f32 %v1463
    %vm1470 = vmor %vm1468, %vm1469
    %v1471 = vsel %vm1470, %v1463, %v1467
    %v1472 = vand.u32 2147483647, %v1462
    %vm1473 = vcmp.eq.f32.partialorder %v1472, 8.507059e+37
    %v1474 = vand.u32 %v1462, 2147483648
    %v1475 = vor.u32 1.1754944e-38, %v1474
    %v1476 = vsel %vm1473, %v1475, %v1471
    %v1477 = vmul.f32 1.0, %v1476
    %v1478 = vrot.slane %v1436, 2
    %v1480 = vxor.u32 %v1478, 2147483648
    %v1481 = vmul.f32 %v1480, 1.442695
    %v1482 = vpow.pop %v1481
    %v1483 = vadd.f32 %v1482, 1.0
    %v1484 = vrcp.pop %v1483
    %v1485 = vmul.f32 %v1483, %v1484
    %v1486 = vsub.f32 1.0, %v1485
    %v1487 = vmul.f32 %v1484, %v1486
    %v1488 = vadd.f32 %v1484, %v1487
    %vm1489 = vweird.f32 %v1483
    %vm1490 = vweird.f32 %v1484
    %vm1491 = vmor %vm1489, %vm1490
    %v1492 = vsel %vm1491, %v1484, %v1488
    %v1493 = vand.u32 2147483647, %v1483
    %vm1494 = vcmp.eq.f32.partialorder %v1493, 8.507059e+37
    %v1495 = vand.u32 %v1483, 2147483648
    %v1496 = vor.u32 1.1754944e-38, %v1495
    %v1497 = vsel %vm1494, %v1496, %v1492
    %v1498 = vmul.f32 1.0, %v1497
    %v1499 = vrot.slane %v1436, 3
    %v1501 = vtanh.pop %v1499
    %v1502 = vmul.f32 %v1477, %v1338
    %v1503 = vmul.f32 %v1455, %v1501
    %v1504 = vadd.f32 %v1502, %v1503
    %v1505 = vtanh.pop %v1504
    %v1506 = vmul.f32 %v1498, %v1505
    %1507 = vst.msk [vmem:[#allocation2 + $0x7] sm:$0x1] %vm344, %v1506
    %v1508 = vld [vmem:[#allocation2] sm:$0xff]
    %v1509 = vlaneseq
    %v1510 = vshrl.u32 %v1509, 7
    %v1511 = vlaneseq
    %v1512 = vand.u32 %v1511, 127
    %v1513 = vadd.s32 %v1510, %v1512
    %vm1514 = vcmp.eq.s32.totalorder %v1513, 7
    %v1515 = vsel %vm1514, 1.0, 0.0
    %1517 = vrot.lane.b32.xlu0 %v1508, 96
    %v1518 = vpop.permute.xlu0 %1517
    %vm1520 = vcmask 64512
    %v1522 = vsel %vm1520, %v1515, 0
    %1524 = vmatpush.msra.mxu0 0.0
    %1525 = vmatpush.msra.mxu0 0.0
    %1526 = vmatpush.msra.mxu0 0.0
    %1527 = vmatpush.msra.mxu0 0.0
    %1528 = vmatpush.msra.mxu0 0.0
    %1529 = vmatpush.msra.mxu0 0.0
    %1530 = vmatpush.msra.mxu0 0.0
    %1531 = vmatpush.msra.mxu0 0.0
    %1532 = vmatpush.msra.mxu0 0.0
    %1533 = vmatpush.msra.mxu0 0.0
    %1534 = vmatpush.msra.mxu0 0.0
    %1535 = vmatpush.msra.mxu0 0.0
    %1536 = vmatpush.msra.mxu0 0.0
    %1537 = vmatpush.msra.mxu0 0.0
    %1538 = vmatpush.msra.mxu0 0.0
    %1539 = vmatpush.msra.mxu0 %v1518
    %1540 = vmatmul.f32.gmra.mxu0 %v1522
    %v1541 = vpop.f32.mrf.mxu0
    %v1542 = vadd.f32 0.0, %v1541
    %1543 = vdwg.mxu0
    %v1544 = vld [vmem:[%s4] sm:$0xff]
    %v1545 = vld [vmem:[%s4 + $0x8] sm:$0xff]
    %v1546 = vld [vmem:[%s4 + $0x10] sm:$0xff]
    %v1547 = vld [vmem:[%s4 + $0x18] sm:$0xff]
    %v1548 = vld [vmem:[%s5] sm:$0xff]
    %v1549 = vld [vmem:[%s5 + $0x8] sm:$0xff]
    %v1550 = vld [vmem:[%s5 + $0x10] sm:$0xff]
    %v1551 = vld [vmem:[%s5 + $0x18] sm:$0xff]
    %vm1552 = vcmask 261120
    %v1554 = vsel %vm1552, %v1542, 0
    %1556 = vmatpush.msra.mxu0 0.0
    %1557 = vmatpush.msra.mxu0 0.0
    %1558 = vmatpush.msra.mxu0 0.0
    %1559 = vmatpush.msra.mxu0 0.0
    %1560 = vmatpush.msra.mxu0 0.0
    %1561 = vmatpush.msra.mxu0 0.0
    %1562 = vmatpush.msra.mxu0 0.0
    %1563 = vmatpush.msra.mxu0 0.0
    %1564 = vmatpush.msra.mxu0 0.0
    %1565 = vmatpush.msra.mxu0 0.0
    %1566 = vmatpush.msra.mxu0 0.0
    %1567 = vmatpush.msra.mxu0 0.0
    %1568 = vmatpush.msra.mxu0 %v1551
    %1569 = vmatpush.msra.mxu0 %v1550
    %1570 = vmatpush.msra.mxu0 %v1549
    %1571 = vmatpush.msra.mxu0 %v1548
    %1572 = vmatmul.f32.gmra.mxu0 %v1554
    %v1573 = vpop.f32.mrf.mxu0
    %v1574 = vadd.f32 0.0, %v1573
    %1575 = vdwg.mxu0
    %v1576 = vsel %vm1552, %v1508, 0
    %1578 = vmatpush.msra.mxu0 0.0
    %1579 = vmatpush.msra.mxu0 0.0
    %1580 = vmatpush.msra.mxu0 0.0
    %1581 = vmatpush.msra.mxu0 0.0
    %1582 = vmatpush.msra.mxu0 0.0
    %1583 = vmatpush.msra.mxu0 0.0
    %1584 = vmatpush.msra.mxu0 0.0
    %1585 = vmatpush.msra.mxu0 0.0
    %1586 = vmatpush.msra.mxu0 0.0
    %1587 = vmatpush.msra.mxu0 0.0
    %1588 = vmatpush.msra.mxu0 0.0
    %1589 = vmatpush.msra.mxu0 0.0
    %1590 = vmatpush.msra.mxu0 %v1547
    %1591 = vmatpush.msra.mxu0 %v1546
    %1592 = vmatpush.msra.mxu0 %v1545
    %1593 = vmatpush.msra.mxu0 %v1544
    %1594 = vmatmul.f32.gmra.mxu0 %v1576
    %v1595 = vpop.f32.mrf.mxu0
    %v1596 = vadd.f32 %v1574, %v1595
    %1597 = vdwg.mxu0
    %v1598 = vld [vmem:[%s6] sm:$0x1]
    %v1600 = vperm.slane %v1598, 0
    %v1602 = vadd.f32 %v1596, %v1600
    %1603 = vst.msk [vmem:[#allocation11] sm:$0xff] %vm1520, %v1602
    // Predicated region
    $region46: #{ner_forward.1} parent=1 // pred_check
      _
    $region47: #{ner_forward.1} parent=1 // pred_check_branch
      %1605 = sbr.rel (0) target = $region49
    $region48: #{ner_forward.1} parent=1 // pred_region
      %1607 = vsyncadd [#allocation5], 0
      %s1609 = sshll.u32 [#allocation11], 4
      %s1610 = int_to_ptr.vmem [resolvable:$true] %s1609
      %s1611 = sshll.u32 %s7, 4
      %s1612 = int_to_ptr.hbm [resolvable:$true] %s1611
      %1614 = dma.vmem_to_hbm [thread:$0]  %s1610, 128, %s1612, [#allocation5]
    $region49: #{ner_forward.1} parent=1 // pred_fallthru
      _
    // Predicated region
    $region50: #{ner_forward.1} parent=1 // pred_check
      _
    $region51: #{ner_forward.1} parent=1 // pred_check_branch
      %1616 = sbr.rel (0) target = $region53
    $region52: #{ner_forward.1} parent=1 // pred_region
      %1618 = dma.done [#allocation5], 128
    $region53: #{ner_forward.1} parent=1 // pred_fallthru
      _
    %1619 = vsyncpa [#allocation4], 1
    %1620 = vsyncpa [#allocation9], 1
    %1621 = vsyncpa [#allocation5], 1
    %1622 = vsyncpa [#allocation6], 1

</llo_original>
